<compile_context>
chip_gen: v5e
topology: v5e:2x2
jax: 0.10.0
libtpu: 0.0.40
codegen_flags: <defaults>
</compile_context>

<pallas_src>
import math

import jax
import jax.numpy as jnp
from jax.experimental import pallas as pl
from jax.experimental.pallas import tpu as pltpu

# ----------------------------- config (small, deterministic) -----------------
B = 2          # batch
S = 8          # decoder sequence length
S_ENC = 8      # encoder sequence length
D = 32         # attention_hidden_dim
F = 64         # ffn_hidden_dim
H = 4          # nheads
DH = D // H    # per-head dim
EPS = 1e-5

BF16 = jnp.bfloat16


def _mm(a, w):
    """bf16 x bf16 matmul with f32 accumulation (MXU-native)."""
    return jnp.dot(a.astype(BF16), w.astype(BF16),
                   preferred_element_type=jnp.float32)


def _add_and_norm(a, b):
    """LayerNorm(a + b) over last dim, no learnable affine. f32 math."""
    z = a + b
    mu = jnp.mean(z, axis=-1, keepdims=True)
    var = jnp.mean(jnp.square(z - mu), axis=-1, keepdims=True)
    return (z - mu) * jax.lax.rsqrt(var + EPS)


def _split_heads(t, bc, rows, d, dh):
    """(bc*rows, d) f32 -> (H*bc, rows, dh) bf16, heads folded into batch dim."""
    t3 = t.reshape(bc, rows, d).astype(BF16)
    heads = [t3[:, :, h * dh:(h + 1) * dh] for h in range(H)]
    return jnp.stack(heads, axis=0).reshape(H * bc, rows, dh)


def _merge_heads(t, bc, rows, d, dh):
    """(H*bc, rows, dh) f32 -> (bc*rows, d) f32."""
    t4 = t.reshape(H, bc, rows, dh)
    return jnp.concatenate([t4[h] for h in range(H)], axis=-1).reshape(bc * rows, d)


def _mha(q_in, kv_in, w, b, bc, sq, sk, self_attn):
    """Multi-head attention with packed weights, no mask.

    q_in: (bc*sq, D), kv_in: (bc*sk, D).
    w: (D, 4D) packed [wq | wk | wv | wo]; b: (1, 4D) packed biases.
    All projections are full-width (rows x 128); q/k/v and the wo output block
    are sliced from the f32 results, never from the weight/bias operands.
    """
    d = w.shape[0]
    dh = d // H

    if self_attn:   # one fused full-width projection of the decoder stream
        proj = _mm(q_in, w) + b                              # (bc*sq, 4D)
        q, k, v = proj[:, :d], proj[:, d:2 * d], proj[:, 2 * d:3 * d]
    else:           # Q from decoder stream, K/V from encoder stream
        q = (_mm(q_in, w) + b)[:, :d]                        # (bc*sq, D)
        kvp = _mm(kv_in, w) + b                              # (bc*sk, 4D)
        k, v = kvp[:, d:2 * d], kvp[:, 2 * d:3 * d]

    qh = _split_heads(q, bc, sq, d, dh)                      # (H*bc, sq, dh)
    kh = _split_heads(k, bc, sk, d, dh)                      # (H*bc, sk, dh)
    vh = _split_heads(v, bc, sk, d, dh)                      # (H*bc, sk, dh)

    # Attention core: single leading batch dim (H*bc) -> two batched einsums.
    scale = 1.0 / math.sqrt(dh)
    s = jnp.einsum('bqd,bkd->bqk', qh, kh,
                   preferred_element_type=jnp.float32) * scale
    s = s - jnp.max(s, axis=-1, keepdims=True)
    p = jnp.exp(s)
    p = p * pl.reciprocal(jnp.sum(p, axis=-1, keepdims=True), approx=True)
    oh = jnp.einsum('bqk,bkd->bqd', p.astype(BF16), vh,
                    preferred_element_type=jnp.float32)      # (H*bc, sq, dh)

    o = _merge_heads(oh, bc, sq, d, dh)                      # (bc*sq, D)

    # Output projection: full-width matmul, take the wo column block of the result.
    return (_mm(o, w) + b)[:, 3 * d:]


def decoder_layer_kernel(x_ref, enc_ref, attn_w_ref, attn_b_ref,
                         w1_ref, b1_ref, w2_ref, b2_ref, out_ref):
    bc, s, d = x_ref.shape
    s_enc = enc_ref.shape[1]

    # fold the batch chunk into the sublane (row) dim for all projections / FFN
    x = x_ref[...].reshape(bc * s, d)                        # bf16
    enc = enc_ref[...].reshape(bc * s_enc, d)                # bf16
    x32 = x.astype(jnp.float32)

    # ---- self-attention + add&norm -----------------------------------------
    sa = _mha(x, x, attn_w_ref[0], attn_b_ref[0], bc, s, s, self_attn=True)
    h1 = _add_and_norm(x32, sa)

    # ---- cross-attention + add&norm ----------------------------------------
    ca = _mha(h1, enc, attn_w_ref[1], attn_b_ref[1], bc, s, s_enc,
              self_attn=False)
    h2 = _add_and_norm(h1, ca)

    # ---- feed-forward (Linear -> ReLU -> Linear) + add&norm ----------------
    hidden = jnp.maximum(_mm(h2, w1_ref[...]) + b1_ref[...], 0.0)   # (bc*s, F)
    ff = _mm(hidden, w2_ref[...]) + b2_ref[...]                     # (bc*s, D)
    h3 = _add_and_norm(h2, ff)

    out_ref[...] = h3.reshape(bc, s, d).astype(out_ref.dtype)


def _num_batch_chunks(batch, seq):
    """Size-gated batch split. Splitting a tiny batch across two TensorCores
    just duplicates weight DMAs and per-step overhead, so only split when
    there is at least a few hundred rows of work. No device probing (that is
    a reproducibility hazard under AOT / mock compilation)."""
    if batch % 2 == 0 and batch * seq >= 256:
        return 2
    return 1


def transformer_decoder_layer(x, encoder_output, params):
    """x: (B, S, D), encoder_output: (B, S_ENC, D) -> (B, S, D) float32."""
    b, s, d = x.shape
    s_enc = encoder_output.shape[1]
    attn_w, attn_b, w1, b1, w2, b2 = params

    n_chunks = _num_batch_chunks(b, s)
    bc = b // n_chunks

    def rep(shape):  # grid-invariant (replicated) full-array block
        nd = len(shape)
        return pl.BlockSpec(shape, lambda i, nd=nd: (0,) * nd)

    in_specs = [
        pl.BlockSpec((bc, s, d), lambda i: (i, 0, 0)),          # x (bf16)
        pl.BlockSpec((bc, s_enc, d), lambda i: (i, 0, 0)),      # encoder_output (bf16)
        rep(attn_w.shape),                                      # (2, D, 4D) bf16
        rep(attn_b.shape),                                      # (2, 1, 4D) f32
        rep(w1.shape),                                          # (D, F) bf16
        rep(b1.shape),                                          # (1, F) f32
        rep(w2.shape),                                          # (F, D) bf16 (canonical)
        rep(b2.shape),                                          # (1, D) f32
    ]
    out_specs = pl.BlockSpec((bc, s, d), lambda i: (i, 0, 0))

    return pl.pallas_call(
        decoder_layer_kernel,
        out_shape=jax.ShapeDtypeStruct((b, s, d), jnp.float32),
        grid=(n_chunks,),
        in_specs=in_specs,
        out_specs=out_specs,
        compiler_params=pltpu.CompilerParams(
            dimension_semantics=("parallel",)),
    )(x.astype(BF16), encoder_output.astype(BF16),
      attn_w.astype(BF16), attn_b,
      w1.astype(BF16), b1, w2.astype(BF16), b2)


def init_params(key):
    """Deterministic parameters (PyTorch-Linear-style uniform bounds)."""
    keys = jax.random.split(key, 20)
    ki = iter(keys)

    def linear(in_dim, out_dim):
        bound = 1.0 / math.sqrt(in_dim)
        w = jax.random.uniform(next(ki), (in_dim, out_dim), jnp.float32,
                               -bound, bound)
        bvec = jax.random.uniform(next(ki), (1, out_dim), jnp.float32,
                                  -bound, bound)
        return w, bvec

    def attn_pack():
        ws, bs = [], []
        for _ in range(4):                      # q, k, v, o
            w, bvec = linear(D, D)
            ws.append(w)
            bs.append(bvec)
        return jnp.concatenate(ws, axis=1), jnp.concatenate(bs, axis=1)

    sa_w, sa_b = attn_pack()                    # (D, 4D), (1, 4D)
    ca_w, ca_b = attn_pack()
    w1, b1 = linear(D, F)                       # (D, F), (1, F)
    w2, b2 = linear(F, D)                       # (F, D), (1, D)  -- canonical, no transpose

    attn_w = jnp.stack([sa_w, ca_w])            # (2, D, 4D)
    attn_b = jnp.stack([sa_b, ca_b])            # (2, 1, 4D)
    return (attn_w, attn_b, w1, b1, w2, b2)


if __name__ == "__main__":
    key = jax.random.PRNGKey(0)
    k_x, k_enc, k_p = jax.random.split(key, 3)

    x = jax.random.normal(k_x, (B, S, D), dtype=jnp.float32)
    encoder_output = jax.random.normal(k_enc, (B, S_ENC, D), dtype=jnp.float32)
    params = init_params(k_p)

    out = transformer_decoder_layer(x, encoder_output, params)
    out = jax.block_until_ready(out)

    assert out.shape == (B, S, D), out.shape
    assert bool(jnp.all(jnp.isfinite(out)))
    print("KERNEL_OK")
</pallas_src>

<mosaic_0001>
module attributes {stable_mosaic.version = 11 : i64} {
  func.func @decoder_layer_kernel(%arg0: i32, %arg1: memref<2x8x32xbf16, #tpu.memory_space<vmem>>, %arg2: memref<2x8x32xbf16, #tpu.memory_space<vmem>>, %arg3: memref<2x32x128xbf16, #tpu.memory_space<vmem>>, %arg4: memref<2x1x128xf32, #tpu.memory_space<vmem>>, %arg5: memref<32x64xbf16, #tpu.memory_space<vmem>>, %arg6: memref<1x64xf32, #tpu.memory_space<vmem>>, %arg7: memref<64x32xbf16, #tpu.memory_space<vmem>>, %arg8: memref<1x32xf32, #tpu.memory_space<vmem>>, %arg9: memref<2x8x32xf32, #tpu.memory_space<vmem>>) attributes {dimension_semantics = [#tpu.dimension_semantics<parallel>], iteration_bounds = array<i64: 1>, scalar_prefetch = 0 : i64, scratch_operands = 0 : i64, tpu.core_type = #tpu.core_type<tc>, window_params = [{transform_indices = @transform_0, window_bounds = array<i64: 2, 8, 32>}, {transform_indices = @transform_1, window_bounds = array<i64: 2, 8, 32>}, {pipeline_mode = #tpu.pipeline_mode<synchronous>, transform_indices = @transform_2, window_bounds = array<i64: 2, 32, 128>}, {pipeline_mode = #tpu.pipeline_mode<synchronous>, transform_indices = @transform_3, window_bounds = array<i64: 2, 1, 128>}, {pipeline_mode = #tpu.pipeline_mode<synchronous>, transform_indices = @transform_4, window_bounds = array<i64: 32, 64>}, {pipeline_mode = #tpu.pipeline_mode<synchronous>, transform_indices = @transform_5, window_bounds = array<i64: 1, 64>}, {pipeline_mode = #tpu.pipeline_mode<synchronous>, transform_indices = @transform_6, window_bounds = array<i64: 64, 32>}, {pipeline_mode = #tpu.pipeline_mode<synchronous>, transform_indices = @transform_7, window_bounds = array<i64: 1, 32>}, {transform_indices = @transform_8, window_bounds = array<i64: 2, 8, 32>}]} {
    %c0 = arith.constant 0 : index
    %c0_0 = arith.constant 0 : index
    %c0_1 = arith.constant 0 : index
    %0 = vector.load %arg1[%c0, %c0_0, %c0_1] : memref<2x8x32xbf16, #tpu.memory_space<vmem>>, vector<2x8x32xbf16>
    %1 = vector.shape_cast %0 : vector<2x8x32xbf16> to vector<16x32xbf16>
    %c0_2 = arith.constant 0 : index
    %c0_3 = arith.constant 0 : index
    %c0_4 = arith.constant 0 : index
    %2 = vector.load %arg2[%c0_2, %c0_3, %c0_4] : memref<2x8x32xbf16, #tpu.memory_space<vmem>>, vector<2x8x32xbf16>
    %3 = vector.shape_cast %2 : vector<2x8x32xbf16> to vector<16x32xbf16>
    %4 = arith.extf %1 : vector<16x32xbf16> to vector<16x32xf32>
    %c0_5 = arith.constant 0 : index
    %c0_6 = arith.constant 0 : index
    %c0_7 = arith.constant 0 : index
    %5 = vector.load %arg3[%c0_5, %c0_6, %c0_7] : memref<2x32x128xbf16, #tpu.memory_space<vmem>>, vector<1x32x128xbf16>
    %6 = vector.shape_cast %5 : vector<1x32x128xbf16> to vector<32x128xbf16>
    %c0_8 = arith.constant 0 : index
    %c0_9 = arith.constant 0 : index
    %c0_10 = arith.constant 0 : index
    %7 = vector.load %arg4[%c0_8, %c0_9, %c0_10] : memref<2x1x128xf32, #tpu.memory_space<vmem>>, vector<1x1x128xf32>
    %8 = vector.shape_cast %7 : vector<1x1x128xf32> to vector<1x128xf32>
    %cst = arith.constant dense<0.000000e+00> : vector<16x128xf32>
    %9 = tpu.matmul %1, %6, %cst {dimension_numbers = #tpu.dot_dimension_numbers<[1], [0], [0], [1], [0, 0, 1, 1], [], []>} : vector<16x32xbf16>, vector<32x128xbf16>, vector<16x128xf32> -> vector<16x128xf32>
    %10 = vector.broadcast %8 : vector<1x128xf32> to vector<16x128xf32>
    %11 = arith.addf %9, %10 : vector<16x128xf32>
    %12 = vector.extract_strided_slice %11 {offsets = [0, 0], sizes = [16, 32], strides = [1, 1]} : vector<16x128xf32> to vector<16x32xf32>
    %13 = vector.extract_strided_slice %11 {offsets = [0, 32], sizes = [16, 32], strides = [1, 1]} : vector<16x128xf32> to vector<16x32xf32>
    %14 = vector.extract_strided_slice %11 {offsets = [0, 64], sizes = [16, 32], strides = [1, 1]} : vector<16x128xf32> to vector<16x32xf32>
    %15 = vector.shape_cast %12 : vector<16x32xf32> to vector<2x8x32xf32>
    %16 = arith.truncf %15 : vector<2x8x32xf32> to vector<2x8x32xbf16>
    %17 = vector.extract_strided_slice %16 {offsets = [0, 0, 0], sizes = [2, 8, 8], strides = [1, 1, 1]} : vector<2x8x32xbf16> to vector<2x8x8xbf16>
    %18 = vector.extract_strided_slice %16 {offsets = [0, 0, 8], sizes = [2, 8, 8], strides = [1, 1, 1]} : vector<2x8x32xbf16> to vector<2x8x8xbf16>
    %19 = vector.extract_strided_slice %16 {offsets = [0, 0, 16], sizes = [2, 8, 8], strides = [1, 1, 1]} : vector<2x8x32xbf16> to vector<2x8x8xbf16>
    %20 = vector.extract_strided_slice %16 {offsets = [0, 0, 24], sizes = [2, 8, 8], strides = [1, 1, 1]} : vector<2x8x32xbf16> to vector<2x8x8xbf16>
    %21 = vector.shape_cast %17 : vector<2x8x8xbf16> to vector<1x2x8x8xbf16>
    %22 = vector.shape_cast %18 : vector<2x8x8xbf16> to vector<1x2x8x8xbf16>
    %23 = vector.shape_cast %19 : vector<2x8x8xbf16> to vector<1x2x8x8xbf16>
    %24 = vector.shape_cast %20 : vector<2x8x8xbf16> to vector<1x2x8x8xbf16>
    %25 = tpu.concatenate %21, %22, %23, %24 in 0 : vector<1x2x8x8xbf16>, vector<1x2x8x8xbf16>, vector<1x2x8x8xbf16>, vector<1x2x8x8xbf16> -> vector<4x2x8x8xbf16>
    %26 = vector.shape_cast %25 : vector<4x2x8x8xbf16> to vector<8x8x8xbf16>
    %27 = vector.shape_cast %13 : vector<16x32xf32> to vector<2x8x32xf32>
    %28 = arith.truncf %27 : vector<2x8x32xf32> to vector<2x8x32xbf16>
    %29 = vector.extract_strided_slice %28 {offsets = [0, 0, 0], sizes = [2, 8, 8], strides = [1, 1, 1]} : vector<2x8x32xbf16> to vector<2x8x8xbf16>
    %30 = vector.extract_strided_slice %28 {offsets = [0, 0, 8], sizes = [2, 8, 8], strides = [1, 1, 1]} : vector<2x8x32xbf16> to vector<2x8x8xbf16>
    %31 = vector.extract_strided_slice %28 {offsets = [0, 0, 16], sizes = [2, 8, 8], strides = [1, 1, 1]} : vector<2x8x32xbf16> to vector<2x8x8xbf16>
    %32 = vector.extract_strided_slice %28 {offsets = [0, 0, 24], sizes = [2, 8, 8], strides = [1, 1, 1]} : vector<2x8x32xbf16> to vector<2x8x8xbf16>
    %33 = vector.shape_cast %29 : vector<2x8x8xbf16> to vector<1x2x8x8xbf16>
    %34 = vector.shape_cast %30 : vector<2x8x8xbf16> to vector<1x2x8x8xbf16>
    %35 = vector.shape_cast %31 : vector<2x8x8xbf16> to vector<1x2x8x8xbf16>
    %36 = vector.shape_cast %32 : vector<2x8x8xbf16> to vector<1x2x8x8xbf16>
    %37 = tpu.concatenate %33, %34, %35, %36 in 0 : vector<1x2x8x8xbf16>, vector<1x2x8x8xbf16>, vector<1x2x8x8xbf16>, vector<1x2x8x8xbf16> -> vector<4x2x8x8xbf16>
    %38 = vector.shape_cast %37 : vector<4x2x8x8xbf16> to vector<8x8x8xbf16>
    %39 = vector.shape_cast %14 : vector<16x32xf32> to vector<2x8x32xf32>
    %40 = arith.truncf %39 : vector<2x8x32xf32> to vector<2x8x32xbf16>
    %41 = vector.extract_strided_slice %40 {offsets = [0, 0, 0], sizes = [2, 8, 8], strides = [1, 1, 1]} : vector<2x8x32xbf16> to vector<2x8x8xbf16>
    %42 = vector.extract_strided_slice %40 {offsets = [0, 0, 8], sizes = [2, 8, 8], strides = [1, 1, 1]} : vector<2x8x32xbf16> to vector<2x8x8xbf16>
    %43 = vector.extract_strided_slice %40 {offsets = [0, 0, 16], sizes = [2, 8, 8], strides = [1, 1, 1]} : vector<2x8x32xbf16> to vector<2x8x8xbf16>
    %44 = vector.extract_strided_slice %40 {offsets = [0, 0, 24], sizes = [2, 8, 8], strides = [1, 1, 1]} : vector<2x8x32xbf16> to vector<2x8x8xbf16>
    %45 = vector.shape_cast %41 : vector<2x8x8xbf16> to vector<1x2x8x8xbf16>
    %46 = vector.shape_cast %42 : vector<2x8x8xbf16> to vector<1x2x8x8xbf16>
    %47 = vector.shape_cast %43 : vector<2x8x8xbf16> to vector<1x2x8x8xbf16>
    %48 = vector.shape_cast %44 : vector<2x8x8xbf16> to vector<1x2x8x8xbf16>
    %49 = tpu.concatenate %45, %46, %47, %48 in 0 : vector<1x2x8x8xbf16>, vector<1x2x8x8xbf16>, vector<1x2x8x8xbf16>, vector<1x2x8x8xbf16> -> vector<4x2x8x8xbf16>
    %50 = vector.shape_cast %49 : vector<4x2x8x8xbf16> to vector<8x8x8xbf16>
    "tpu.trace_start"() <{level = 10 : i32, message = "bqd,bkd->bqk"}> : () -> ()
    %cst_11 = arith.constant dense<0.000000e+00> : vector<8x8x8xf32>
    %51 = tpu.matmul %26, %38, %cst_11 {dimension_numbers = #tpu.dot_dimension_numbers<[2], [2], [1], [1], [0, 0, 0, 1, 1, 1], [0], [0]>} : vector<8x8x8xbf16>, vector<8x8x8xbf16>, vector<8x8x8xf32> -> vector<8x8x8xf32>
    "tpu.trace_stop"() : () -> ()
    %cst_12 = arith.constant 0.353553385 : f32
    %52 = vector.broadcast %cst_12 : f32 to vector<8x8x8xf32>
    %53 = arith.mulf %51, %52 : vector<8x8x8xf32>
    %cst_13 = arith.constant dense<0xFF800000> : vector<8x8xf32>
    %54 = vector.multi_reduction <maximumf>, %53, %cst_13 [2] : vector<8x8x8xf32> to vector<8x8xf32>
    %55 = vector.shape_cast %54 : vector<8x8xf32> to vector<8x8x1xf32>
    %56 = vector.broadcast %55 : vector<8x8x1xf32> to vector<8x8x8xf32>
    %57 = arith.subf %53, %56 : vector<8x8x8xf32>
    %58 = math.exp %57 : vector<8x8x8xf32>
    %cst_14 = arith.constant dense<0.000000e+00> : vector<8x8xf32>
    %59 = vector.multi_reduction <add>, %58, %cst_14 [2] : vector<8x8x8xf32> to vector<8x8xf32>
    %60 = vector.shape_cast %59 : vector<8x8xf32> to vector<8x8x1xf32>
    %61 = tpu.reciprocal %60 {approx = true} : vector<8x8x1xf32> -> vector<8x8x1xf32>
    %62 = vector.broadcast %61 : vector<8x8x1xf32> to vector<8x8x8xf32>
    %63 = arith.mulf %58, %62 : vector<8x8x8xf32>
    %64 = arith.truncf %63 : vector<8x8x8xf32> to vector<8x8x8xbf16>
    "tpu.trace_start"() <{level = 10 : i32, message = "bqk,bkd->bqd"}> : () -> ()
    %cst_15 = arith.constant dense<0.000000e+00> : vector<8x8x8xf32>
    %65 = tpu.matmul %64, %50, %cst_15 {dimension_numbers = #tpu.dot_dimension_numbers<[2], [1], [1], [2], [0, 0, 0, 1, 1, 2], [0], [0]>} : vector<8x8x8xbf16>, vector<8x8x8xbf16>, vector<8x8x8xf32> -> vector<8x8x8xf32>
    "tpu.trace_stop"() : () -> ()
    %66 = vector.shape_cast %65 : vector<8x8x8xf32> to vector<4x2x8x8xf32>
    %67 = vector.extract_strided_slice %66 {offsets = [0, 0, 0, 0], sizes = [1, 2, 8, 8], strides = [1, 1, 1, 1]} : vector<4x2x8x8xf32> to vector<1x2x8x8xf32>
    %68 = vector.shape_cast %67 : vector<1x2x8x8xf32> to vector<2x8x8xf32>
    %69 = vector.extract_strided_slice %66 {offsets = [1, 0, 0, 0], sizes = [1, 2, 8, 8], strides = [1, 1, 1, 1]} : vector<4x2x8x8xf32> to vector<1x2x8x8xf32>
    %70 = vector.shape_cast %69 : vector<1x2x8x8xf32> to vector<2x8x8xf32>
    %71 = vector.extract_strided_slice %66 {offsets = [2, 0, 0, 0], sizes = [1, 2, 8, 8], strides = [1, 1, 1, 1]} : vector<4x2x8x8xf32> to vector<1x2x8x8xf32>
    %72 = vector.shape_cast %71 : vector<1x2x8x8xf32> to vector<2x8x8xf32>
    %73 = vector.extract_strided_slice %66 {offsets = [3, 0, 0, 0], sizes = [1, 2, 8, 8], strides = [1, 1, 1, 1]} : vector<4x2x8x8xf32> to vector<1x2x8x8xf32>
    %74 = vector.shape_cast %73 : vector<1x2x8x8xf32> to vector<2x8x8xf32>
    %75 = tpu.concatenate %68, %70, %72, %74 in 2 : vector<2x8x8xf32>, vector<2x8x8xf32>, vector<2x8x8xf32>, vector<2x8x8xf32> -> vector<2x8x32xf32>
    %76 = vector.shape_cast %75 : vector<2x8x32xf32> to vector<16x32xf32>
    %77 = arith.truncf %76 : vector<16x32xf32> to vector<16x32xbf16>
    %cst_16 = arith.constant dense<0.000000e+00> : vector<16x128xf32>
    %78 = tpu.matmul %77, %6, %cst_16 {dimension_numbers = #tpu.dot_dimension_numbers<[1], [0], [0], [1], [0, 0, 1, 1], [], []>} : vector<16x32xbf16>, vector<32x128xbf16>, vector<16x128xf32> -> vector<16x128xf32>
    %79 = vector.broadcast %8 : vector<1x128xf32> to vector<16x128xf32>
    %80 = arith.addf %78, %79 : vector<16x128xf32>
    %81 = vector.extract_strided_slice %80 {offsets = [0, 96], sizes = [16, 32], strides = [1, 1]} : vector<16x128xf32> to vector<16x32xf32>
    %82 = arith.addf %4, %81 : vector<16x32xf32>
    %cst_17 = arith.constant dense<0.000000e+00> : vector<16xf32>
    %83 = vector.multi_reduction <add>, %82, %cst_17 [1] : vector<16x32xf32> to vector<16xf32>
    %84 = vector.shape_cast %83 : vector<16xf32> to vector<16x1xf32>
    %cst_18 = arith.constant 3.200000e+01 : f32
    %85 = vector.broadcast %cst_18 : f32 to vector<16x1xf32>
    %86 = arith.divf %84, %85 : vector<16x1xf32>
    %87 = vector.broadcast %86 : vector<16x1xf32> to vector<16x32xf32>
    %88 = arith.subf %82, %87 : vector<16x32xf32>
    %89 = arith.mulf %88, %88 : vector<16x32xf32>
    %cst_19 = arith.constant dense<0.000000e+00> : vector<16xf32>
    %90 = vector.multi_reduction <add>, %89, %cst_19 [1] : vector<16x32xf32> to vector<16xf32>
    %91 = vector.shape_cast %90 : vector<16xf32> to vector<16x1xf32>
    %cst_20 = arith.constant 3.200000e+01 : f32
    %92 = vector.broadcast %cst_20 : f32 to vector<16x1xf32>
    %93 = arith.divf %91, %92 : vector<16x1xf32>
    %94 = vector.broadcast %86 : vector<16x1xf32> to vector<16x32xf32>
    %95 = arith.subf %82, %94 : vector<16x32xf32>
    %cst_21 = arith.constant 9.99999974E-6 : f32
    %96 = vector.broadcast %cst_21 : f32 to vector<16x1xf32>
    %97 = arith.addf %93, %96 : vector<16x1xf32>
    %98 = math.rsqrt %97 : vector<16x1xf32>
    %99 = vector.broadcast %98 : vector<16x1xf32> to vector<16x32xf32>
    %100 = arith.mulf %95, %99 : vector<16x32xf32>
    %c1 = arith.constant 1 : index
    %c0_22 = arith.constant 0 : index
    %c0_23 = arith.constant 0 : index
    %101 = vector.load %arg3[%c1, %c0_22, %c0_23] : memref<2x32x128xbf16, #tpu.memory_space<vmem>>, vector<1x32x128xbf16>
    %102 = vector.shape_cast %101 : vector<1x32x128xbf16> to vector<32x128xbf16>
    %c1_24 = arith.constant 1 : index
    %c0_25 = arith.constant 0 : index
    %c0_26 = arith.constant 0 : index
    %103 = vector.load %arg4[%c1_24, %c0_25, %c0_26] : memref<2x1x128xf32, #tpu.memory_space<vmem>>, vector<1x1x128xf32>
    %104 = vector.shape_cast %103 : vector<1x1x128xf32> to vector<1x128xf32>
    %105 = arith.truncf %100 : vector<16x32xf32> to vector<16x32xbf16>
    %cst_27 = arith.constant dense<0.000000e+00> : vector<16x128xf32>
    %106 = tpu.matmul %105, %102, %cst_27 {dimension_numbers = #tpu.dot_dimension_numbers<[1], [0], [0], [1], [0, 0, 1, 1], [], []>} : vector<16x32xbf16>, vector<32x128xbf16>, vector<16x128xf32> -> vector<16x128xf32>
    %107 = vector.broadcast %104 : vector<1x128xf32> to vector<16x128xf32>
    %108 = arith.addf %106, %107 : vector<16x128xf32>
    %109 = vector.extract_strided_slice %108 {offsets = [0, 0], sizes = [16, 32], strides = [1, 1]} : vector<16x128xf32> to vector<16x32xf32>
    %cst_28 = arith.constant dense<0.000000e+00> : vector<16x128xf32>
    %110 = tpu.matmul %3, %102, %cst_28 {dimension_numbers = #tpu.dot_dimension_numbers<[1], [0], [0], [1], [0, 0, 1, 1], [], []>} : vector<16x32xbf16>, vector<32x128xbf16>, vector<16x128xf32> -> vector<16x128xf32>
    %111 = vector.broadcast %104 : vector<1x128xf32> to vector<16x128xf32>
    %112 = arith.addf %110, %111 : vector<16x128xf32>
    %113 = vector.extract_strided_slice %112 {offsets = [0, 32], sizes = [16, 32], strides = [1, 1]} : vector<16x128xf32> to vector<16x32xf32>
    %114 = vector.extract_strided_slice %112 {offsets = [0, 64], sizes = [16, 32], strides = [1, 1]} : vector<16x128xf32> to vector<16x32xf32>
    %115 = vector.shape_cast %109 : vector<16x32xf32> to vector<2x8x32xf32>
    %116 = arith.truncf %115 : vector<2x8x32xf32> to vector<2x8x32xbf16>
    %117 = vector.extract_strided_slice %116 {offsets = [0, 0, 0], sizes = [2, 8, 8], strides = [1, 1, 1]} : vector<2x8x32xbf16> to vector<2x8x8xbf16>
    %118 = vector.extract_strided_slice %116 {offsets = [0, 0, 8], sizes = [2, 8, 8], strides = [1, 1, 1]} : vector<2x8x32xbf16> to vector<2x8x8xbf16>
    %119 = vector.extract_strided_slice %116 {offsets = [0, 0, 16], sizes = [2, 8, 8], strides = [1, 1, 1]} : vector<2x8x32xbf16> to vector<2x8x8xbf16>
    %120 = vector.extract_strided_slice %116 {offsets = [0, 0, 24], sizes = [2, 8, 8], strides = [1, 1, 1]} : vector<2x8x32xbf16> to vector<2x8x8xbf16>
    %121 = vector.shape_cast %117 : vector<2x8x8xbf16> to vector<1x2x8x8xbf16>
    %122 = vector.shape_cast %118 : vector<2x8x8xbf16> to vector<1x2x8x8xbf16>
    %123 = vector.shape_cast %119 : vector<2x8x8xbf16> to vector<1x2x8x8xbf16>
    %124 = vector.shape_cast %120 : vector<2x8x8xbf16> to vector<1x2x8x8xbf16>
    %125 = tpu.concatenate %121, %122, %123, %124 in 0 : vector<1x2x8x8xbf16>, vector<1x2x8x8xbf16>, vector<1x2x8x8xbf16>, vector<1x2x8x8xbf16> -> vector<4x2x8x8xbf16>
    %126 = vector.shape_cast %125 : vector<4x2x8x8xbf16> to vector<8x8x8xbf16>
    %127 = vector.shape_cast %113 : vector<16x32xf32> to vector<2x8x32xf32>
    %128 = arith.truncf %127 : vector<2x8x32xf32> to vector<2x8x32xbf16>
    %129 = vector.extract_strided_slice %128 {offsets = [0, 0, 0], sizes = [2, 8, 8], strides = [1, 1, 1]} : vector<2x8x32xbf16> to vector<2x8x8xbf16>
    %130 = vector.extract_strided_slice %128 {offsets = [0, 0, 8], sizes = [2, 8, 8], strides = [1, 1, 1]} : vector<2x8x32xbf16> to vector<2x8x8xbf16>
    %131 = vector.extract_strided_slice %128 {offsets = [0, 0, 16], sizes = [2, 8, 8], strides = [1, 1, 1]} : vector<2x8x32xbf16> to vector<2x8x8xbf16>
    %132 = vector.extract_strided_slice %128 {offsets = [0, 0, 24], sizes = [2, 8, 8], strides = [1, 1, 1]} : vector<2x8x32xbf16> to vector<2x8x8xbf16>
    %133 = vector.shape_cast %129 : vector<2x8x8xbf16> to vector<1x2x8x8xbf16>
    %134 = vector.shape_cast %130 : vector<2x8x8xbf16> to vector<1x2x8x8xbf16>
    %135 = vector.shape_cast %131 : vector<2x8x8xbf16> to vector<1x2x8x8xbf16>
    %136 = vector.shape_cast %132 : vector<2x8x8xbf16> to vector<1x2x8x8xbf16>
    %137 = tpu.concatenate %133, %134, %135, %136 in 0 : vector<1x2x8x8xbf16>, vector<1x2x8x8xbf16>, vector<1x2x8x8xbf16>, vector<1x2x8x8xbf16> -> vector<4x2x8x8xbf16>
    %138 = vector.shape_cast %137 : vector<4x2x8x8xbf16> to vector<8x8x8xbf16>
    %139 = vector.shape_cast %114 : vector<16x32xf32> to vector<2x8x32xf32>
    %140 = arith.truncf %139 : vector<2x8x32xf32> to vector<2x8x32xbf16>
    %141 = vector.extract_strided_slice %140 {offsets = [0, 0, 0], sizes = [2, 8, 8], strides = [1, 1, 1]} : vector<2x8x32xbf16> to vector<2x8x8xbf16>
    %142 = vector.extract_strided_slice %140 {offsets = [0, 0, 8], sizes = [2, 8, 8], strides = [1, 1, 1]} : vector<2x8x32xbf16> to vector<2x8x8xbf16>
    %143 = vector.extract_strided_slice %140 {offsets = [0, 0, 16], sizes = [2, 8, 8], strides = [1, 1, 1]} : vector<2x8x32xbf16> to vector<2x8x8xbf16>
    %144 = vector.extract_strided_slice %140 {offsets = [0, 0, 24], sizes = [2, 8, 8], strides = [1, 1, 1]} : vector<2x8x32xbf16> to vector<2x8x8xbf16>
    %145 = vector.shape_cast %141 : vector<2x8x8xbf16> to vector<1x2x8x8xbf16>
    %146 = vector.shape_cast %142 : vector<2x8x8xbf16> to vector<1x2x8x8xbf16>
    %147 = vector.shape_cast %143 : vector<2x8x8xbf16> to vector<1x2x8x8xbf16>
    %148 = vector.shape_cast %144 : vector<2x8x8xbf16> to vector<1x2x8x8xbf16>
    %149 = tpu.concatenate %145, %146, %147, %148 in 0 : vector<1x2x8x8xbf16>, vector<1x2x8x8xbf16>, vector<1x2x8x8xbf16>, vector<1x2x8x8xbf16> -> vector<4x2x8x8xbf16>
    %150 = vector.shape_cast %149 : vector<4x2x8x8xbf16> to vector<8x8x8xbf16>
    "tpu.trace_start"() <{level = 10 : i32, message = "bqd,bkd->bqk"}> : () -> ()
    %cst_29 = arith.constant dense<0.000000e+00> : vector<8x8x8xf32>
    %151 = tpu.matmul %126, %138, %cst_29 {dimension_numbers = #tpu.dot_dimension_numbers<[2], [2], [1], [1], [0, 0, 0, 1, 1, 1], [0], [0]>} : vector<8x8x8xbf16>, vector<8x8x8xbf16>, vector<8x8x8xf32> -> vector<8x8x8xf32>
    "tpu.trace_stop"() : () -> ()
    %cst_30 = arith.constant 0.353553385 : f32
    %152 = vector.broadcast %cst_30 : f32 to vector<8x8x8xf32>
    %153 = arith.mulf %151, %152 : vector<8x8x8xf32>
    %cst_31 = arith.constant dense<0xFF800000> : vector<8x8xf32>
    %154 = vector.multi_reduction <maximumf>, %153, %cst_31 [2] : vector<8x8x8xf32> to vector<8x8xf32>
    %155 = vector.shape_cast %154 : vector<8x8xf32> to vector<8x8x1xf32>
    %156 = vector.broadcast %155 : vector<8x8x1xf32> to vector<8x8x8xf32>
    %157 = arith.subf %153, %156 : vector<8x8x8xf32>
    %158 = math.exp %157 : vector<8x8x8xf32>
    %cst_32 = arith.constant dense<0.000000e+00> : vector<8x8xf32>
    %159 = vector.multi_reduction <add>, %158, %cst_32 [2] : vector<8x8x8xf32> to vector<8x8xf32>
    %160 = vector.shape_cast %159 : vector<8x8xf32> to vector<8x8x1xf32>
    %161 = tpu.reciprocal %160 {approx = true} : vector<8x8x1xf32> -> vector<8x8x1xf32>
    %162 = vector.broadcast %161 : vector<8x8x1xf32> to vector<8x8x8xf32>
    %163 = arith.mulf %158, %162 : vector<8x8x8xf32>
    %164 = arith.truncf %163 : vector<8x8x8xf32> to vector<8x8x8xbf16>
    "tpu.trace_start"() <{level = 10 : i32, message = "bqk,bkd->bqd"}> : () -> ()
    %cst_33 = arith.constant dense<0.000000e+00> : vector<8x8x8xf32>
    %165 = tpu.matmul %164, %150, %cst_33 {dimension_numbers = #tpu.dot_dimension_numbers<[2], [1], [1], [2], [0, 0, 0, 1, 1, 2], [0], [0]>} : vector<8x8x8xbf16>, vector<8x8x8xbf16>, vector<8x8x8xf32> -> vector<8x8x8xf32>
    "tpu.trace_stop"() : () -> ()
    %166 = vector.shape_cast %165 : vector<8x8x8xf32> to vector<4x2x8x8xf32>
    %167 = vector.extract_strided_slice %166 {offsets = [0, 0, 0, 0], sizes = [1, 2, 8, 8], strides = [1, 1, 1, 1]} : vector<4x2x8x8xf32> to vector<1x2x8x8xf32>
    %168 = vector.shape_cast %167 : vector<1x2x8x8xf32> to vector<2x8x8xf32>
    %169 = vector.extract_strided_slice %166 {offsets = [1, 0, 0, 0], sizes = [1, 2, 8, 8], strides = [1, 1, 1, 1]} : vector<4x2x8x8xf32> to vector<1x2x8x8xf32>
    %170 = vector.shape_cast %169 : vector<1x2x8x8xf32> to vector<2x8x8xf32>
    %171 = vector.extract_strided_slice %166 {offsets = [2, 0, 0, 0], sizes = [1, 2, 8, 8], strides = [1, 1, 1, 1]} : vector<4x2x8x8xf32> to vector<1x2x8x8xf32>
    %172 = vector.shape_cast %171 : vector<1x2x8x8xf32> to vector<2x8x8xf32>
    %173 = vector.extract_strided_slice %166 {offsets = [3, 0, 0, 0], sizes = [1, 2, 8, 8], strides = [1, 1, 1, 1]} : vector<4x2x8x8xf32> to vector<1x2x8x8xf32>
    %174 = vector.shape_cast %173 : vector<1x2x8x8xf32> to vector<2x8x8xf32>
    %175 = tpu.concatenate %168, %170, %172, %174 in 2 : vector<2x8x8xf32>, vector<2x8x8xf32>, vector<2x8x8xf32>, vector<2x8x8xf32> -> vector<2x8x32xf32>
    %176 = vector.shape_cast %175 : vector<2x8x32xf32> to vector<16x32xf32>
    %177 = arith.truncf %176 : vector<16x32xf32> to vector<16x32xbf16>
    %cst_34 = arith.constant dense<0.000000e+00> : vector<16x128xf32>
    %178 = tpu.matmul %177, %102, %cst_34 {dimension_numbers = #tpu.dot_dimension_numbers<[1], [0], [0], [1], [0, 0, 1, 1], [], []>} : vector<16x32xbf16>, vector<32x128xbf16>, vector<16x128xf32> -> vector<16x128xf32>
    %179 = vector.broadcast %104 : vector<1x128xf32> to vector<16x128xf32>
    %180 = arith.addf %178, %179 : vector<16x128xf32>
    %181 = vector.extract_strided_slice %180 {offsets = [0, 96], sizes = [16, 32], strides = [1, 1]} : vector<16x128xf32> to vector<16x32xf32>
    %182 = arith.addf %100, %181 : vector<16x32xf32>
    %cst_35 = arith.constant dense<0.000000e+00> : vector<16xf32>
    %183 = vector.multi_reduction <add>, %182, %cst_35 [1] : vector<16x32xf32> to vector<16xf32>
    %184 = vector.shape_cast %183 : vector<16xf32> to vector<16x1xf32>
    %cst_36 = arith.constant 3.200000e+01 : f32
    %185 = vector.broadcast %cst_36 : f32 to vector<16x1xf32>
    %186 = arith.divf %184, %185 : vector<16x1xf32>
    %187 = vector.broadcast %186 : vector<16x1xf32> to vector<16x32xf32>
    %188 = arith.subf %182, %187 : vector<16x32xf32>
    %189 = arith.mulf %188, %188 : vector<16x32xf32>
    %cst_37 = arith.constant dense<0.000000e+00> : vector<16xf32>
    %190 = vector.multi_reduction <add>, %189, %cst_37 [1] : vector<16x32xf32> to vector<16xf32>
    %191 = vector.shape_cast %190 : vector<16xf32> to vector<16x1xf32>
    %cst_38 = arith.constant 3.200000e+01 : f32
    %192 = vector.broadcast %cst_38 : f32 to vector<16x1xf32>
    %193 = arith.divf %191, %192 : vector<16x1xf32>
    %194 = vector.broadcast %186 : vector<16x1xf32> to vector<16x32xf32>
    %195 = arith.subf %182, %194 : vector<16x32xf32>
    %cst_39 = arith.constant 9.99999974E-6 : f32
    %196 = vector.broadcast %cst_39 : f32 to vector<16x1xf32>
    %197 = arith.addf %193, %196 : vector<16x1xf32>
    %198 = math.rsqrt %197 : vector<16x1xf32>
    %199 = vector.broadcast %198 : vector<16x1xf32> to vector<16x32xf32>
    %200 = arith.mulf %195, %199 : vector<16x32xf32>
    %c0_40 = arith.constant 0 : index
    %c0_41 = arith.constant 0 : index
    %201 = vector.load %arg5[%c0_40, %c0_41] : memref<32x64xbf16, #tpu.memory_space<vmem>>, vector<32x64xbf16>
    %202 = arith.truncf %200 : vector<16x32xf32> to vector<16x32xbf16>
    %cst_42 = arith.constant dense<0.000000e+00> : vector<16x64xf32>
    %203 = tpu.matmul %202, %201, %cst_42 {dimension_numbers = #tpu.dot_dimension_numbers<[1], [0], [0], [1], [0, 0, 1, 1], [], []>} : vector<16x32xbf16>, vector<32x64xbf16>, vector<16x64xf32> -> vector<16x64xf32>
    %c0_43 = arith.constant 0 : index
    %c0_44 = arith.constant 0 : index
    %204 = vector.load %arg6[%c0_43, %c0_44] : memref<1x64xf32, #tpu.memory_space<vmem>>, vector<1x64xf32>
    %205 = vector.broadcast %204 : vector<1x64xf32> to vector<16x64xf32>
    %206 = arith.addf %203, %205 : vector<16x64xf32>
    %cst_45 = arith.constant 0.000000e+00 : f32
    %207 = vector.broadcast %cst_45 : f32 to vector<16x64xf32>
    %208 = arith.maximumf %206, %207 : vector<16x64xf32>
    %c0_46 = arith.constant 0 : index
    %c0_47 = arith.constant 0 : index
    %209 = vector.load %arg7[%c0_46, %c0_47] : memref<64x32xbf16, #tpu.memory_space<vmem>>, vector<64x32xbf16>
    %210 = arith.truncf %208 : vector<16x64xf32> to vector<16x64xbf16>
    %cst_48 = arith.constant dense<0.000000e+00> : vector<16x32xf32>
    %211 = tpu.matmul %210, %209, %cst_48 {dimension_numbers = #tpu.dot_dimension_numbers<[1], [0], [0], [1], [0, 0, 1, 1], [], []>} : vector<16x64xbf16>, vector<64x32xbf16>, vector<16x32xf32> -> vector<16x32xf32>
    %c0_49 = arith.constant 0 : index
    %c0_50 = arith.constant 0 : index
    %212 = vector.load %arg8[%c0_49, %c0_50] : memref<1x32xf32, #tpu.memory_space<vmem>>, vector<1x32xf32>
    %213 = vector.broadcast %212 : vector<1x32xf32> to vector<16x32xf32>
    %214 = arith.addf %211, %213 : vector<16x32xf32>
    %215 = arith.addf %200, %214 : vector<16x32xf32>
    %cst_51 = arith.constant dense<0.000000e+00> : vector<16xf32>
    %216 = vector.multi_reduction <add>, %215, %cst_51 [1] : vector<16x32xf32> to vector<16xf32>
    %217 = vector.shape_cast %216 : vector<16xf32> to vector<16x1xf32>
    %cst_52 = arith.constant 3.200000e+01 : f32
    %218 = vector.broadcast %cst_52 : f32 to vector<16x1xf32>
    %219 = arith.divf %217, %218 : vector<16x1xf32>
    %220 = vector.broadcast %219 : vector<16x1xf32> to vector<16x32xf32>
    %221 = arith.subf %215, %220 : vector<16x32xf32>
    %222 = arith.mulf %221, %221 : vector<16x32xf32>
    %cst_53 = arith.constant dense<0.000000e+00> : vector<16xf32>
    %223 = vector.multi_reduction <add>, %222, %cst_53 [1] : vector<16x32xf32> to vector<16xf32>
    %224 = vector.shape_cast %223 : vector<16xf32> to vector<16x1xf32>
    %cst_54 = arith.constant 3.200000e+01 : f32
    %225 = vector.broadcast %cst_54 : f32 to vector<16x1xf32>
    %226 = arith.divf %224, %225 : vector<16x1xf32>
    %227 = vector.broadcast %219 : vector<16x1xf32> to vector<16x32xf32>
    %228 = arith.subf %215, %227 : vector<16x32xf32>
    %cst_55 = arith.constant 9.99999974E-6 : f32
    %229 = vector.broadcast %cst_55 : f32 to vector<16x1xf32>
    %230 = arith.addf %226, %229 : vector<16x1xf32>
    %231 = math.rsqrt %230 : vector<16x1xf32>
    %232 = vector.broadcast %231 : vector<16x1xf32> to vector<16x32xf32>
    %233 = arith.mulf %228, %232 : vector<16x32xf32>
    %234 = vector.shape_cast %233 : vector<16x32xf32> to vector<2x8x32xf32>
    %c0_56 = arith.constant 0 : index
    %c0_57 = arith.constant 0 : index
    %c0_58 = arith.constant 0 : index
    %235 = vector.load %arg9[%c0_56, %c0_57, %c0_58] : memref<2x8x32xf32, #tpu.memory_space<vmem>>, vector<2x8x32xf32>
    tpu.vector_store %arg9[%c0_56, %c0_57, %c0_58], %234 {strides = array<i32>} : memref<2x8x32xf32, #tpu.memory_space<vmem>>, vector<2x8x32xf32>,
    return
  }
  func.func @transform_0(%arg0: i32) -> (i32, i32, i32) {
    %c0_i32 = arith.constant 0 : i32
    %c0_i32_0 = arith.constant 0 : i32
    %c0_i32_1 = arith.constant 0 : i32
    return %arg0, %c0_i32, %c0_i32_0 : i32, i32, i32
  }
  func.func @transform_1(%arg0: i32) -> (i32, i32, i32) {
    %c0_i32 = arith.constant 0 : i32
    %c0_i32_0 = arith.constant 0 : i32
    %c0_i32_1 = arith.constant 0 : i32
    return %arg0, %c0_i32, %c0_i32_0 : i32, i32, i32
  }
  func.func @transform_2(%arg0: i32) -> (i32, i32, i32) {
    %c0_i32 = arith.constant 0 : i32
    %c0_i32_0 = arith.constant 0 : i32
    %c0_i32_1 = arith.constant 0 : i32
    %c0_i32_2 = arith.constant 0 : i32
    return %c0_i32, %c0_i32_0, %c0_i32_1 : i32, i32, i32
  }
  func.func @transform_3(%arg0: i32) -> (i32, i32, i32) {
    %c0_i32 = arith.constant 0 : i32
    %c0_i32_0 = arith.constant 0 : i32
    %c0_i32_1 = arith.constant 0 : i32
    %c0_i32_2 = arith.constant 0 : i32
    return %c0_i32, %c0_i32_0, %c0_i32_1 : i32, i32, i32
  }
  func.func @transform_4(%arg0: i32) -> (i32, i32) {
    %c0_i32 = arith.constant 0 : i32
    %c0_i32_0 = arith.constant 0 : i32
    %c0_i32_1 = arith.constant 0 : i32
    return %c0_i32, %c0_i32_0 : i32, i32
  }
  func.func @transform_5(%arg0: i32) -> (i32, i32) {
    %c0_i32 = arith.constant 0 : i32
    %c0_i32_0 = arith.constant 0 : i32
    %c0_i32_1 = arith.constant 0 : i32
    return %c0_i32, %c0_i32_0 : i32, i32
  }
  func.func @transform_6(%arg0: i32) -> (i32, i32) {
    %c0_i32 = arith.constant 0 : i32
    %c0_i32_0 = arith.constant 0 : i32
    %c0_i32_1 = arith.constant 0 : i32
    return %c0_i32, %c0_i32_0 : i32, i32
  }
  func.func @transform_7(%arg0: i32) -> (i32, i32) {
    %c0_i32 = arith.constant 0 : i32
    %c0_i32_0 = arith.constant 0 : i32
    %c0_i32_1 = arith.constant 0 : i32
    return %c0_i32, %c0_i32_0 : i32, i32
  }
  func.func @transform_8(%arg0: i32) -> (i32, i32, i32) {
    %c0_i32 = arith.constant 0 : i32
    %c0_i32_0 = arith.constant 0 : i32
    %c0_i32_1 = arith.constant 0 : i32
    return %arg0, %c0_i32, %c0_i32_0 : i32, i32, i32
  }
}

</mosaic_0001>

<llo_original>
// kernel: tpu_custom_call.1
$region0: #{tpu_custom_call.1}
  #allocation0 [shape = 'u32[]', space=smem, size = 0x4, offset = 0x4, fixed_abs, tag = 'smem constant byte address 0x4 - core index']
  #allocation1 [shape = 'u32[72,128]{1,0:T(1,128)}', space=vmem, size = 0x9000, scoped, tag = 'internal scratch']
  %s0 = inlined_call_operand.hbm [shape: bf16[2,8,32], index: 0, kind: input, shape index: {}]
  %s1 = inlined_call_operand.hbm [shape: bf16[2,8,32], index: 1, kind: input, shape index: {}]
  %s2 = inlined_call_operand.vmem [shape: bf16[2,32,128], index: 2, kind: input, shape index: {}]
  %s3 = inlined_call_operand.vmem [shape: f32[2,1,128], index: 3, kind: input, shape index: {}]
  %s4 = inlined_call_operand.vmem [shape: bf16[32,64], index: 4, kind: input, shape index: {}]
  %s5 = inlined_call_operand.vmem [shape: f32[1,64], index: 5, kind: input, shape index: {}]
  %s6 = inlined_call_operand.vmem [shape: bf16[64,32], index: 6, kind: input, shape index: {}]
  %s7 = inlined_call_operand.vmem [shape: f32[1,32], index: 7, kind: input, shape index: {}]
  %s8 = inlined_call_operand.hbm [shape: f32[2,8,32], index: 8, kind: output, shape index: {}]
  %s9 = sld [smem:[#allocation0]]
  $region50: #{tpu_custom_call.1} parent=0
    _
  %s11 = ssub.s32 1, %s9
  %s12 = scalar_select 0, %s11, %s9
  $region1: #{tpu_custom_call.1} parent=0
    #allocation2 [shape = 'u8[4096]{0}', space=vmem, size = 0x1000, scoped, tag = 'input window, operand 0, single buffered']
    #allocation3 [shape = 's32[1]{0}', space=sflag, size = 0x4, scoped, tag = 'scoped memory for tpu_custom_call.1']
    #allocation4 [shape = 's32[1]{0}', space=sflag, size = 0x4, scoped, tag = 'scoped memory for tpu_custom_call.1']
    #allocation5 [shape = 'u8[4096]{0}', space=vmem, size = 0x1000, scoped, tag = 'input window, operand 1, single buffered']
    #allocation6 [shape = 's32[1]{0}', space=sflag, size = 0x4, scoped, tag = 'scoped memory for tpu_custom_call.1']
    #allocation7 [shape = 'u8[8192]{0}', space=vmem, size = 0x2000, scoped, tag = 'output window, operand 0, single buffered']
    %13 = vsyncpa [#allocation3], 0
    %14 = vsyncpa [#allocation6], 0
    %15 = vsyncpa [#allocation4], 0
    // Predicated region
    $region2: #{tpu_custom_call.1} parent=1 // pred_check
      _
    $region3: #{tpu_custom_call.1} parent=1 // pred_check_branch
      %17 = sbr.rel (0) target = $region5
    $region4: #{tpu_custom_call.1} parent=1 // pred_region
      %19 = vsyncadd [#allocation3], 0
      %s20 = sshll.u32 %s0, 4
      %s21 = int_to_ptr.hbm [resolvable:$true] %s20
      %s22 = sshll.u32 [#allocation2], 4
      %s23 = int_to_ptr.vmem [resolvable:$true] %s22
      %28 = dma.hbm_to_vmem [thread:$0]  %s21, 128, %s23, [#allocation3], 64, 64, 4
    $region5: #{tpu_custom_call.1} parent=1 // pred_fallthru
      _
    // Predicated region
    $region6: #{tpu_custom_call.1} parent=1 // pred_check
      _
    $region7: #{tpu_custom_call.1} parent=1 // pred_check_branch
      %30 = sbr.rel (0) target = $region9
    $region8: #{tpu_custom_call.1} parent=1 // pred_region
      %32 = vsyncadd [#allocation6], 0
      %s33 = sshll.u32 %s1, 4
      %s34 = int_to_ptr.hbm [resolvable:$true] %s33
      %s35 = sshll.u32 [#allocation5], 4
      %s36 = int_to_ptr.vmem [resolvable:$true] %s35
      %41 = dma.hbm_to_vmem [thread:$0]  %s34, 128, %s36, [#allocation6], 64, 64, 4
    $region9: #{tpu_custom_call.1} parent=1 // pred_fallthru
      _
    // Predicated region
    $region10: #{tpu_custom_call.1} parent=1 // pred_check
      _
    $region11: #{tpu_custom_call.1} parent=1 // pred_check_branch
      %43 = sbr.rel (0) target = $region13
    $region12: #{tpu_custom_call.1} parent=1 // pred_region
      _
    $region13: #{tpu_custom_call.1} parent=1 // pred_fallthru
      _
    // Predicated region
    $region14: #{tpu_custom_call.1} parent=1 // pred_check
      _
    $region15: #{tpu_custom_call.1} parent=1 // pred_check_branch
      %45 = sbr.rel (0) target = $region17
    $region16: #{tpu_custom_call.1} parent=1 // pred_region
      _
    $region17: #{tpu_custom_call.1} parent=1 // pred_fallthru
      _
    // Predicated region
    $region18: #{tpu_custom_call.1} parent=1 // pred_check
      _
    $region19: #{tpu_custom_call.1} parent=1 // pred_check_branch
      %47 = sbr.rel (0) target = $region21
    $region20: #{tpu_custom_call.1} parent=1 // pred_region
      _
    $region21: #{tpu_custom_call.1} parent=1 // pred_fallthru
      _
    // Predicated region
    $region22: #{tpu_custom_call.1} parent=1 // pred_check
      _
    $region23: #{tpu_custom_call.1} parent=1 // pred_check_branch
      %49 = sbr.rel (0) target = $region25
    $region24: #{tpu_custom_call.1} parent=1 // pred_region
      _
    $region25: #{tpu_custom_call.1} parent=1 // pred_fallthru
      _
    // Predicated region
    $region26: #{tpu_custom_call.1} parent=1 // pred_check
      _
    $region27: #{tpu_custom_call.1} parent=1 // pred_check_branch
      %51 = sbr.rel (0) target = $region29
    $region28: #{tpu_custom_call.1} parent=1 // pred_region
      _
    $region29: #{tpu_custom_call.1} parent=1 // pred_fallthru
      _
    // Predicated region
    $region30: #{tpu_custom_call.1} parent=1 // pred_check
      _
    $region31: #{tpu_custom_call.1} parent=1 // pred_check_branch
      %53 = sbr.rel (0) target = $region33
    $region32: #{tpu_custom_call.1} parent=1 // pred_region
      _
    $region33: #{tpu_custom_call.1} parent=1 // pred_fallthru
      _
    // Predicated region
    $region34: #{tpu_custom_call.1} parent=1 // pred_check
      _
    $region35: #{tpu_custom_call.1} parent=1 // pred_check_branch
      %55 = sbr.rel (0) target = $region37
    $region36: #{tpu_custom_call.1} parent=1 // pred_region
      %57 = dma.done [#allocation3], 128
    $region37: #{tpu_custom_call.1} parent=1 // pred_fallthru
      _
    // Predicated region
    $region38: #{tpu_custom_call.1} parent=1 // pred_check
      _
    $region39: #{tpu_custom_call.1} parent=1 // pred_check_branch
      %59 = sbr.rel (0) target = $region41
    $region40: #{tpu_custom_call.1} parent=1 // pred_region
      %61 = dma.done [#allocation6], 128
    $region41: #{tpu_custom_call.1} parent=1 // pred_fallthru
      _
    %v63 = vld [vmem:[#allocation2] sm:$0xf]
    %v64 = vld [vmem:[#allocation2 + $0x4] sm:$0xf]
    %v65 = vld [vmem:[#allocation5] sm:$0xf]
    %v66 = vld [vmem:[#allocation5 + $0x4] sm:$0xf]
    %v67 = vunpack.c.l.bf16 %v63
    %v68 = vunpack.c.l.bf16 %v64
    %v69 = vld [vmem:[%s2] sm:$0xf]
    %v70 = vld [vmem:[%s2 + $0x4] sm:$0xf]
    %v71 = vld [vmem:[%s2 + $0x8] sm:$0xf]
    %v72 = vld [vmem:[%s2 + $0xc] sm:$0xf]
    %v73 = vld [vmem:[%s3] sm:$0x1]
    %v75 = vperm.slane %v73, 0
    %v79 = vunpack.c.l.b16 %v63
    %v80 = vunpack.c.l.b16 %v64
    %v81 = vpack.c.b16 %v80, %v79
    %v86 = vunpack.c.l.b16 %v69
    %v87 = vunpack.c.l.b16 %v70
    %v88 = vunpack.c.l.b16 %v71
    %v89 = vunpack.c.l.b16 %v72
    %v90 = vpack.c.b16 %v87, %v86
    %v91 = vpack.c.b16 %v89, %v88
    %vm94 = vcmask 261120
    %v96 = vsel %vm94, %v81, 0
    %98 = vmatpush.bf16.msra.mxu0 0
    %99 = vmatpush.bf16.msra.mxu0 0
    %100 = vmatpush.bf16.msra.mxu0 0
    %101 = vmatpush.bf16.msra.mxu0 0
    %102 = vmatpush.bf16.msra.mxu0 0
    %103 = vmatpush.bf16.msra.mxu0 0
    %104 = vmatpush.bf16.msra.mxu0 %v91
    %105 = vmatpush.bf16.msra.mxu0 %v90
    %106 = vmatmul.bf16.gmra.mxu0 %v96
    %v107 = vpop.f32.mrf.mxu0
    %v108 = vadd.f32 %v75, %v107
    %v109 = vpop.f32.mrf.mxu0
    %v110 = vadd.f32 %v75, %v109
    %111 = vdwg.mxu0
    %v112 = vpack.c.bf16 %v108, %v108
    %v113 = vpack.c.bf16 %v110, %v110
    %116 = vrot.lane.b32.xlu0 %v112, 120
    %v117 = vpop.permute.xlu0 %116
    %118 = vrot.lane.b32.xlu0 %v113, 120
    %v119 = vpop.permute.xlu0 %118
    %120 = vrot.lane.b32.xlu0 %v112, 112
    %v121 = vpop.permute.xlu0 %120
    %122 = vrot.lane.b32.xlu0 %v113, 112
    %v123 = vpop.permute.xlu0 %122
    %124 = vrot.lane.b32.xlu0 %v112, 104
    %v125 = vpop.permute.xlu0 %124
    %126 = vrot.lane.b32.xlu0 %v113, 104
    %v127 = vpop.permute.xlu0 %126
    %v128 = vunpack.c.l.b16 %v112
    %v129 = vpack.c.b16 %v128, %v128
    %130 = vrot.lane.b32.xlu0 %v129, 96
    %v131 = vpop.permute.xlu0 %130
    %vm132 = vcmask 64512
    %v134 = vsel %vm132, %v112, 0
    %v137 = vsel %vm132, %v131, 0
    %139 = vmatpush.bf16.xpose.msra.mxu0 0
    %140 = vmatpush.bf16.xpose.msra.mxu0 0
    %141 = vmatpush.bf16.xpose.msra.mxu0 0
    %142 = vmatpush.bf16.xpose.msra.mxu0 0
    %143 = vmatpush.bf16.xpose.msra.mxu0 0
    %144 = vmatpush.bf16.xpose.msra.mxu0 0
    %145 = vmatpush.bf16.xpose.msra.mxu0 0
    %146 = vmatpush.bf16.xpose.msra.mxu0 %v137
    %147 = vmatmul.bf16.gmra.mxu0 %v134
    %v148 = vpop.f32.mrf.mxu0
    %v149 = vadd.f32 0.0, %v148
    %v150 = vpop.f32.mrf.mxu0
    %151 = vdwg.mxu0
    %v152 = vunpack.c.l.b16 %v113
    %v153 = vpack.c.b16 %v152, %v152
    %154 = vrot.lane.b32.xlu0 %v153, 96
    %v155 = vpop.permute.xlu0 %154
    %v157 = vsel %vm132, %v113, 0
    %v160 = vsel %vm132, %v155, 0
    %162 = vmatpush.bf16.xpose.msra.mxu0 0
    %163 = vmatpush.bf16.xpose.msra.mxu0 0
    %164 = vmatpush.bf16.xpose.msra.mxu0 0
    %165 = vmatpush.bf16.xpose.msra.mxu0 0
    %166 = vmatpush.bf16.xpose.msra.mxu0 0
    %167 = vmatpush.bf16.xpose.msra.mxu0 0
    %168 = vmatpush.bf16.xpose.msra.mxu0 0
    %169 = vmatpush.bf16.xpose.msra.mxu0 %v160
    %170 = vmatmul.bf16.gmra.mxu0 %v157
    %v171 = vpop.f32.mrf.mxu0
    %v172 = vadd.f32 0.0, %v171
    %v173 = vpop.f32.mrf.mxu0
    %174 = vdwg.mxu0
    %v175 = vunpack.c.l.b16 %v117
    %v176 = vpack.c.b16 %v175, %v175
    %177 = vrot.lane.b32.xlu0 %v176, 96
    %v178 = vpop.permute.xlu0 %177
    %v180 = vsel %vm132, %v117, 0
    %v183 = vsel %vm132, %v178, 0
    %185 = vmatpush.bf16.xpose.msra.mxu0 0
    %186 = vmatpush.bf16.xpose.msra.mxu0 0
    %187 = vmatpush.bf16.xpose.msra.mxu0 0
    %188 = vmatpush.bf16.xpose.msra.mxu0 0
    %189 = vmatpush.bf16.xpose.msra.mxu0 0
    %190 = vmatpush.bf16.xpose.msra.mxu0 0
    %191 = vmatpush.bf16.xpose.msra.mxu0 0
    %192 = vmatpush.bf16.xpose.msra.mxu0 %v183
    %193 = vmatmul.bf16.gmra.mxu0 %v180
    %v194 = vpop.f32.mrf.mxu0
    %v195 = vadd.f32 0.0, %v194
    %v196 = vpop.f32.mrf.mxu0
    %197 = vdwg.mxu0
    %v198 = vunpack.c.l.b16 %v119
    %v199 = vpack.c.b16 %v198, %v198
    %200 = vrot.lane.b32.xlu0 %v199, 96
    %v201 = vpop.permute.xlu0 %200
    %v203 = vsel %vm132, %v119, 0
    %v206 = vsel %vm132, %v201, 0
    %208 = vmatpush.bf16.xpose.msra.mxu0 0
    %209 = vmatpush.bf16.xpose.msra.mxu0 0
    %210 = vmatpush.bf16.xpose.msra.mxu0 0
    %211 = vmatpush.bf16.xpose.msra.mxu0 0
    %212 = vmatpush.bf16.xpose.msra.mxu0 0
    %213 = vmatpush.bf16.xpose.msra.mxu0 0
    %214 = vmatpush.bf16.xpose.msra.mxu0 0
    %215 = vmatpush.bf16.xpose.msra.mxu0 %v206
    %216 = vmatmul.bf16.gmra.mxu0 %v203
    %v217 = vpop.f32.mrf.mxu0
    %v218 = vadd.f32 0.0, %v217
    %v219 = vpop.f32.mrf.mxu0
    %220 = vdwg.mxu0
    %v221 = vunpack.c.l.b16 %v121
    %v222 = vpack.c.b16 %v221, %v221
    %223 = vrot.lane.b32.xlu0 %v222, 96
    %v224 = vpop.permute.xlu0 %223
    %v226 = vsel %vm132, %v121, 0
    %v229 = vsel %vm132, %v224, 0
    %231 = vmatpush.bf16.xpose.msra.mxu0 0
    %232 = vmatpush.bf16.xpose.msra.mxu0 0
    %233 = vmatpush.bf16.xpose.msra.mxu0 0
    %234 = vmatpush.bf16.xpose.msra.mxu0 0
    %235 = vmatpush.bf16.xpose.msra.mxu0 0
    %236 = vmatpush.bf16.xpose.msra.mxu0 0
    %237 = vmatpush.bf16.xpose.msra.mxu0 0
    %238 = vmatpush.bf16.xpose.msra.mxu0 %v229
    %239 = vmatmul.bf16.gmra.mxu0 %v226
    %v240 = vpop.f32.mrf.mxu0
    %v241 = vadd.f32 0.0, %v240
    %v242 = vpop.f32.mrf.mxu0
    %243 = vdwg.mxu0
    %v244 = vunpack.c.l.b16 %v123
    %v245 = vpack.c.b16 %v244, %v244
    %246 = vrot.lane.b32.xlu0 %v245, 96
    %v247 = vpop.permute.xlu0 %246
    %v249 = vsel %vm132, %v123, 0
    %v252 = vsel %vm132, %v247, 0
    %254 = vmatpush.bf16.xpose.msra.mxu0 0
    %255 = vmatpush.bf16.xpose.msra.mxu0 0
    %256 = vmatpush.bf16.xpose.msra.mxu0 0
    %257 = vmatpush.bf16.xpose.msra.mxu0 0
    %258 = vmatpush.bf16.xpose.msra.mxu0 0
    %259 = vmatpush.bf16.xpose.msra.mxu0 0
    %260 = vmatpush.bf16.xpose.msra.mxu0 0
    %261 = vmatpush.bf16.xpose.msra.mxu0 %v252
    %262 = vmatmul.bf16.gmra.mxu0 %v249
    %v263 = vpop.f32.mrf.mxu0
    %v264 = vadd.f32 0.0, %v263
    %v265 = vpop.f32.mrf.mxu0
    %266 = vdwg.mxu0
    %v267 = vunpack.c.l.b16 %v125
    %v268 = vpack.c.b16 %v267, %v267
    %269 = vrot.lane.b32.xlu0 %v268, 96
    %v270 = vpop.permute.xlu0 %269
    %v272 = vsel %vm132, %v125, 0
    %v275 = vsel %vm132, %v270, 0
    %277 = vmatpush.bf16.xpose.msra.mxu0 0
    %278 = vmatpush.bf16.xpose.msra.mxu0 0
    %279 = vmatpush.bf16.xpose.msra.mxu0 0
    %280 = vmatpush.bf16.xpose.msra.mxu0 0
    %281 = vmatpush.bf16.xpose.msra.mxu0 0
    %282 = vmatpush.bf16.xpose.msra.mxu0 0
    %283 = vmatpush.bf16.xpose.msra.mxu0 0
    %284 = vmatpush.bf16.xpose.msra.mxu0 %v275
    %285 = vmatmul.bf16.gmra.mxu0 %v272
    %v286 = vpop.f32.mrf.mxu0
    %v287 = vadd.f32 0.0, %v286
    %v288 = vpop.f32.mrf.mxu0
    %289 = vdwg.mxu0
    %v290 = vunpack.c.l.b16 %v127
    %v291 = vpack.c.b16 %v290, %v290
    %292 = vrot.lane.b32.xlu0 %v291, 96
    %v293 = vpop.permute.xlu0 %292
    %v295 = vsel %vm132, %v127, 0
    %v298 = vsel %vm132, %v293, 0
    %300 = vmatpush.bf16.xpose.msra.mxu0 0
    %301 = vmatpush.bf16.xpose.msra.mxu0 0
    %302 = vmatpush.bf16.xpose.msra.mxu0 0
    %303 = vmatpush.bf16.xpose.msra.mxu0 0
    %304 = vmatpush.bf16.xpose.msra.mxu0 0
    %305 = vmatpush.bf16.xpose.msra.mxu0 0
    %306 = vmatpush.bf16.xpose.msra.mxu0 0
    %307 = vmatpush.bf16.xpose.msra.mxu0 %v298
    %308 = vmatmul.bf16.gmra.mxu0 %v295
    %v309 = vpop.f32.mrf.mxu0
    %v310 = vadd.f32 0.0, %v309
    %v311 = vpop.f32.mrf.mxu0
    %312 = vdwg.mxu0
    %v313 = vmul.f32 %v149, 0.35355338
    %v314 = vmul.f32 %v172, 0.35355338
    %v315 = vmul.f32 %v195, 0.35355338
    %v316 = vmul.f32 %v218, 0.35355338
    %v317 = vmul.f32 %v241, 0.35355338
    %v318 = vmul.f32 %v264, 0.35355338
    %v319 = vmul.f32 %v287, 0.35355338
    %v320 = vmul.f32 %v310, 0.35355338
    %v321 = vsel %vm132, %v313, -inf
    %322 = vmax.xlane.f32.xlu0 %v321
    %v323 = vpop.xlane.xlu0 %322
    %v324 = vsel %vm132, %v314, -inf
    %325 = vmax.xlane.f32.xlu0 %v324
    %v326 = vpop.xlane.xlu0 %325
    %v327 = vsel %vm132, %v315, -inf
    %328 = vmax.xlane.f32.xlu0 %v327
    %v329 = vpop.xlane.xlu0 %328
    %v330 = vsel %vm132, %v316, -inf
    %331 = vmax.xlane.f32.xlu0 %v330
    %v332 = vpop.xlane.xlu0 %331
    %v333 = vsel %vm132, %v317, -inf
    %334 = vmax.xlane.f32.xlu0 %v333
    %v335 = vpop.xlane.xlu0 %334
    %v336 = vsel %vm132, %v318, -inf
    %337 = vmax.xlane.f32.xlu0 %v336
    %v338 = vpop.xlane.xlu0 %337
    %v339 = vsel %vm132, %v319, -inf
    %340 = vmax.xlane.f32.xlu0 %v339
    %v341 = vpop.xlane.xlu0 %340
    %v342 = vsel %vm132, %v320, -inf
    %343 = vmax.xlane.f32.xlu0 %v342
    %v344 = vpop.xlane.xlu0 %343
    %v345 = vsub.f32 %v313, %v323
    %v346 = vsub.f32 %v314, %v326
    %v347 = vsub.f32 %v315, %v329
    %v348 = vsub.f32 %v316, %v332
    %v349 = vsub.f32 %v317, %v335
    %v350 = vsub.f32 %v318, %v338
    %v351 = vsub.f32 %v319, %v341
    %v352 = vsub.f32 %v320, %v344
    %v353 = vmul.f32 %v345, 1.442695
    %v354 = vpow.pop %v353
    %v355 = vmul.f32 %v346, 1.442695
    %v356 = vpow.pop %v355
    %v357 = vmul.f32 %v347, 1.442695
    %v358 = vpow.pop %v357
    %v359 = vmul.f32 %v348, 1.442695
    %v360 = vpow.pop %v359
    %v361 = vmul.f32 %v349, 1.442695
    %v362 = vpow.pop %v361
    %v363 = vmul.f32 %v350, 1.442695
    %v364 = vpow.pop %v363
    %v365 = vmul.f32 %v351, 1.442695
    %v366 = vpow.pop %v365
    %v367 = vmul.f32 %v352, 1.442695
    %v368 = vpow.pop %v367
    %v369 = vsel %vm132, %v354, 0.0
    %370 = vadd.xlane.f32.xlu0 %v369
    %v371 = vpop.xlane.xlu0 %370
    %v372 = vsel %vm132, %v356, 0.0
    %373 = vadd.xlane.f32.xlu0 %v372
    %v374 = vpop.xlane.xlu0 %373
    %v375 = vsel %vm132, %v358, 0.0
    %376 = vadd.xlane.f32.xlu0 %v375
    %v377 = vpop.xlane.xlu0 %376
    %v378 = vsel %vm132, %v360, 0.0
    %379 = vadd.xlane.f32.xlu0 %v378
    %v380 = vpop.xlane.xlu0 %379
    %v381 = vsel %vm132, %v362, 0.0
    %382 = vadd.xlane.f32.xlu0 %v381
    %v383 = vpop.xlane.xlu0 %382
    %v384 = vsel %vm132, %v364, 0.0
    %385 = vadd.xlane.f32.xlu0 %v384
    %v386 = vpop.xlane.xlu0 %385
    %v387 = vsel %vm132, %v366, 0.0
    %388 = vadd.xlane.f32.xlu0 %v387
    %v389 = vpop.xlane.xlu0 %388
    %v390 = vsel %vm132, %v368, 0.0
    %391 = vadd.xlane.f32.xlu0 %v390
    %v392 = vpop.xlane.xlu0 %391
    %v393 = vrcp.pop %v371
    %v394 = vrcp.pop %v374
    %v395 = vrcp.pop %v377
    %v396 = vrcp.pop %v380
    %v397 = vrcp.pop %v383
    %v398 = vrcp.pop %v386
    %v399 = vrcp.pop %v389
    %v400 = vrcp.pop %v392
    %v401 = vmul.f32 %v354, %v393
    %v402 = vmul.f32 %v356, %v394
    %v403 = vmul.f32 %v358, %v395
    %v404 = vmul.f32 %v360, %v396
    %v405 = vmul.f32 %v362, %v397
    %v406 = vmul.f32 %v364, %v398
    %v407 = vmul.f32 %v366, %v399
    %v408 = vmul.f32 %v368, %v400
    %v409 = vpack.c.bf16 %v401, %v401
    %v410 = vpack.c.bf16 %v402, %v402
    %v411 = vpack.c.bf16 %v403, %v403
    %v412 = vpack.c.bf16 %v404, %v404
    %v413 = vpack.c.bf16 %v405, %v405
    %v414 = vpack.c.bf16 %v406, %v406
    %v415 = vpack.c.bf16 %v407, %v407
    %v416 = vpack.c.bf16 %v408, %v408
    %417 = vrot.lane.b32.xlu0 %v129, 64
    %v418 = vpop.permute.xlu0 %417
    %v420 = vsel %vm132, %v409, 0
    %vm422 = vcmask 1043456
    %v424 = vsel %vm422, %v418, 0
    %426 = vmatpush.bf16.msra.mxu0 0
    %427 = vmatpush.bf16.msra.mxu0 0
    %428 = vmatpush.bf16.msra.mxu0 0
    %429 = vmatpush.bf16.msra.mxu0 0
    %430 = vmatpush.bf16.msra.mxu0 0
    %431 = vmatpush.bf16.msra.mxu0 0
    %432 = vmatpush.bf16.msra.mxu0 0
    %433 = vmatpush.bf16.msra.mxu0 %v424
    %434 = vmatmul.bf16.gmra.mxu0 %v420
    %v435 = vpop.f32.mrf.mxu0
    %v436 = vadd.f32 0.0, %v435
    %v437 = vpop.f32.mrf.mxu0
    %438 = vdwg.mxu0
    %439 = vrot.lane.b32.xlu0 %v153, 64
    %v440 = vpop.permute.xlu0 %439
    %v442 = vsel %vm132, %v410, 0
    %v445 = vsel %vm422, %v440, 0
    %447 = vmatpush.bf16.msra.mxu0 0
    %448 = vmatpush.bf16.msra.mxu0 0
    %449 = vmatpush.bf16.msra.mxu0 0
    %450 = vmatpush.bf16.msra.mxu0 0
    %451 = vmatpush.bf16.msra.mxu0 0
    %452 = vmatpush.bf16.msra.mxu0 0
    %453 = vmatpush.bf16.msra.mxu0 0
    %454 = vmatpush.bf16.msra.mxu0 %v445
    %455 = vmatmul.bf16.gmra.mxu0 %v442
    %v456 = vpop.f32.mrf.mxu0
    %v457 = vadd.f32 0.0, %v456
    %v458 = vpop.f32.mrf.mxu0
    %459 = vdwg.mxu0
    %460 = vrot.lane.b32.xlu0 %v176, 64
    %v461 = vpop.permute.xlu0 %460
    %v463 = vsel %vm132, %v411, 0
    %v466 = vsel %vm422, %v461, 0
    %468 = vmatpush.bf16.msra.mxu0 0
    %469 = vmatpush.bf16.msra.mxu0 0
    %470 = vmatpush.bf16.msra.mxu0 0
    %471 = vmatpush.bf16.msra.mxu0 0
    %472 = vmatpush.bf16.msra.mxu0 0
    %473 = vmatpush.bf16.msra.mxu0 0
    %474 = vmatpush.bf16.msra.mxu0 0
    %475 = vmatpush.bf16.msra.mxu0 %v466
    %476 = vmatmul.bf16.gmra.mxu0 %v463
    %v477 = vpop.f32.mrf.mxu0
    %v478 = vadd.f32 0.0, %v477
    %v479 = vpop.f32.mrf.mxu0
    %480 = vdwg.mxu0
    %481 = vrot.lane.b32.xlu0 %v199, 64
    %v482 = vpop.permute.xlu0 %481
    %v484 = vsel %vm132, %v412, 0
    %v487 = vsel %vm422, %v482, 0
    %489 = vmatpush.bf16.msra.mxu0 0
    %490 = vmatpush.bf16.msra.mxu0 0
    %491 = vmatpush.bf16.msra.mxu0 0
    %492 = vmatpush.bf16.msra.mxu0 0
    %493 = vmatpush.bf16.msra.mxu0 0
    %494 = vmatpush.bf16.msra.mxu0 0
    %495 = vmatpush.bf16.msra.mxu0 0
    %496 = vmatpush.bf16.msra.mxu0 %v487
    %497 = vmatmul.bf16.gmra.mxu0 %v484
    %v498 = vpop.f32.mrf.mxu0
    %v499 = vadd.f32 0.0, %v498
    %v500 = vpop.f32.mrf.mxu0
    %501 = vdwg.mxu0
    %502 = vrot.lane.b32.xlu0 %v222, 64
    %v503 = vpop.permute.xlu0 %502
    %v505 = vsel %vm132, %v413, 0
    %v508 = vsel %vm422, %v503, 0
    %510 = vmatpush.bf16.msra.mxu0 0
    %511 = vmatpush.bf16.msra.mxu0 0
    %512 = vmatpush.bf16.msra.mxu0 0
    %513 = vmatpush.bf16.msra.mxu0 0
    %514 = vmatpush.bf16.msra.mxu0 0
    %515 = vmatpush.bf16.msra.mxu0 0
    %516 = vmatpush.bf16.msra.mxu0 0
    %517 = vmatpush.bf16.msra.mxu0 %v508
    %518 = vmatmul.bf16.gmra.mxu0 %v505
    %v519 = vpop.f32.mrf.mxu0
    %v520 = vadd.f32 0.0, %v519
    %v521 = vpop.f32.mrf.mxu0
    %522 = vdwg.mxu0
    %523 = vrot.lane.b32.xlu0 %v245, 64
    %v524 = vpop.permute.xlu0 %523
    %v526 = vsel %vm132, %v414, 0
    %v529 = vsel %vm422, %v524, 0
    %531 = vmatpush.bf16.msra.mxu0 0
    %532 = vmatpush.bf16.msra.mxu0 0
    %533 = vmatpush.bf16.msra.mxu0 0
    %534 = vmatpush.bf16.msra.mxu0 0
    %535 = vmatpush.bf16.msra.mxu0 0
    %536 = vmatpush.bf16.msra.mxu0 0
    %537 = vmatpush.bf16.msra.mxu0 0
    %538 = vmatpush.bf16.msra.mxu0 %v529
    %539 = vmatmul.bf16.gmra.mxu0 %v526
    %v540 = vpop.f32.mrf.mxu0
    %v541 = vadd.f32 0.0, %v540
    %v542 = vpop.f32.mrf.mxu0
    %543 = vdwg.mxu0
    %544 = vrot.lane.b32.xlu0 %v268, 64
    %v545 = vpop.permute.xlu0 %544
    %v547 = vsel %vm132, %v415, 0
    %v550 = vsel %vm422, %v545, 0
    %552 = vmatpush.bf16.msra.mxu0 0
    %553 = vmatpush.bf16.msra.mxu0 0
    %554 = vmatpush.bf16.msra.mxu0 0
    %555 = vmatpush.bf16.msra.mxu0 0
    %556 = vmatpush.bf16.msra.mxu0 0
    %557 = vmatpush.bf16.msra.mxu0 0
    %558 = vmatpush.bf16.msra.mxu0 0
    %559 = vmatpush.bf16.msra.mxu0 %v550
    %560 = vmatmul.bf16.gmra.mxu0 %v547
    %v561 = vpop.f32.mrf.mxu0
    %v562 = vadd.f32 0.0, %v561
    %v563 = vpop.f32.mrf.mxu0
    %564 = vdwg.mxu0
    %565 = vrot.lane.b32.xlu0 %v291, 64
    %v566 = vpop.permute.xlu0 %565
    %v568 = vsel %vm132, %v416, 0
    %v571 = vsel %vm422, %v566, 0
    %573 = vmatpush.bf16.msra.mxu0 0
    %574 = vmatpush.bf16.msra.mxu0 0
    %575 = vmatpush.bf16.msra.mxu0 0
    %576 = vmatpush.bf16.msra.mxu0 0
    %577 = vmatpush.bf16.msra.mxu0 0
    %578 = vmatpush.bf16.msra.mxu0 0
    %579 = vmatpush.bf16.msra.mxu0 0
    %580 = vmatpush.bf16.msra.mxu0 %v571
    %581 = vmatmul.bf16.gmra.mxu0 %v568
    %v582 = vpop.f32.mrf.mxu0
    %v583 = vadd.f32 0.0, %v582
    %v584 = vpop.f32.mrf.mxu0
    %585 = vdwg.mxu0
    %588 = vrot.lane.b32.xlu0 %v478, 8
    %v589 = vpop.permute.xlu0 %588
    %590 = vrot.lane.b32.xlu0 %v499, 8
    %v591 = vpop.permute.xlu0 %590
    %596 = vrot.lane.b32.xlu0 %v520, 16
    %v597 = vpop.permute.xlu0 %596
    %598 = vrot.lane.b32.xlu0 %v541, 16
    %v599 = vpop.permute.xlu0 %598
    %604 = vrot.lane.b32.xlu0 %v562, 24
    %v605 = vpop.permute.xlu0 %604
    %606 = vrot.lane.b32.xlu0 %v583, 24
    %v607 = vpop.permute.xlu0 %606
    %v610 = vsel %vm132, %v436, %v589
    %v611 = vsel %vm132, %v457, %v591
    %vm612 = vcmask 130048
    %v613 = vsel %vm612, %v610, %v597
    %v614 = vsel %vm612, %v611, %v599
    %vm615 = vcmask 195584
    %v616 = vsel %vm615, %v613, %v605
    %v617 = vsel %vm615, %v614, %v607
    %v618 = vpack.c.bf16 %v617, %v616
    %v620 = vsel %vm94, %v618, 0
    %622 = vmatpush.bf16.msra.mxu0 0
    %623 = vmatpush.bf16.msra.mxu0 0
    %624 = vmatpush.bf16.msra.mxu0 0
    %625 = vmatpush.bf16.msra.mxu0 0
    %626 = vmatpush.bf16.msra.mxu0 0
    %627 = vmatpush.bf16.msra.mxu0 0
    %628 = vmatpush.bf16.msra.mxu0 %v91
    %629 = vmatpush.bf16.msra.mxu0 %v90
    %630 = vmatmul.bf16.gmra.mxu0 %v620
    %v631 = vpop.f32.mrf.mxu0
    %v632 = vadd.f32 %v75, %v631
    %v633 = vpop.f32.mrf.mxu0
    %v634 = vadd.f32 %v75, %v633
    %635 = vdwg.mxu0
    %638 = vrot.lane.b32.xlu0 %v632, 32
    %v639 = vpop.permute.xlu0 %638
    %640 = vrot.lane.b32.xlu0 %v634, 32
    %v641 = vpop.permute.xlu0 %640
    %v644 = vadd.f32 %v67, %v639
    %v645 = vadd.f32 %v68, %v641
    %v646 = vsel %vm94, %v644, 0.0
    %647 = vadd.xlane.f32.xlu0 %v646
    %v648 = vpop.xlane.xlu0 %647
    %v649 = vsel %vm94, %v645, 0.0
    %650 = vadd.xlane.f32.xlu0 %v649
    %v651 = vpop.xlane.xlu0 %650
    %v652 = vrcp.pop 32.0
    %v653 = vmul.f32 32.0, %v652
    %v654 = vsub.f32 1.0, %v653
    %v655 = vmul.f32 %v652, %v654
    %v656 = vadd.f32 %v652, %v655
    %vm657 = vweird.f32 %v652
    %v658 = vsel %vm657, %v652, %v656
    %v659 = vmul.f32 %v648, %v658
    %v660 = vmul.f32 %v651, %v658
    %v661 = vsub.f32 %v644, %v659
    %v662 = vsub.f32 %v645, %v660
    %v663 = vmul.f32 %v661, %v661
    %v664 = vmul.f32 %v662, %v662
    %v665 = vsel %vm94, %v663, 0.0
    %666 = vadd.xlane.f32.xlu0 %v665
    %v667 = vpop.xlane.xlu0 %666
    %v668 = vsel %vm94, %v664, 0.0
    %669 = vadd.xlane.f32.xlu0 %v668
    %v670 = vpop.xlane.xlu0 %669
    %v671 = vmul.f32 %v667, %v658
    %v672 = vmul.f32 %v670, %v658
    %v673 = vadd.f32 %v671, 1e-05
    %v674 = vadd.f32 %v672, 1e-05
    %v675 = vrsqrt.pop %v673
    %v676 = vmul.f32 %v675, %v673
    %v677 = vmul.f32 %v676, %v675
    %v678 = vmul.f32 0.5, %v677
    %v679 = vsub.f32 1.5, %v678
    %v680 = vmul.f32 %v675, %v679
    %vm681 = vweird.f32 %v673
    %vm682 = vweird.f32 %v675
    %vm683 = vmor %vm681, %vm682
    %v684 = vsel %vm683, %v675, %v680
    %v685 = vrsqrt.pop %v674
    %v686 = vmul.f32 %v685, %v674
    %v687 = vmul.f32 %v686, %v685
    %v688 = vmul.f32 0.5, %v687
    %v689 = vsub.f32 1.5, %v688
    %v690 = vmul.f32 %v685, %v689
    %vm691 = vweird.f32 %v674
    %vm692 = vweird.f32 %v685
    %vm693 = vmor %vm691, %vm692
    %v694 = vsel %vm693, %v685, %v690
    %v695 = vmul.f32 %v661, %v684
    %v696 = vmul.f32 %v662, %v694
    %s697 = scalar_lea.vmem %s2, 16
    %v698 = vld [vmem:[%s697] sm:$0xf]
    %v699 = vld [vmem:[%s697 + $0x4] sm:$0xf]
    %v700 = vld [vmem:[%s697 + $0x8] sm:$0xf]
    %v701 = vld [vmem:[%s697 + $0xc] sm:$0xf]
    %s702 = scalar_lea.vmem %s3, 1
    %v703 = vld [vmem:[%s702] sm:$0x1]
    %v704 = vpack.c.bf16 %v696, %v695
    %v706 = vperm.slane %v703, 0
    %v712 = vunpack.c.l.b16 %v698
    %v713 = vunpack.c.l.b16 %v699
    %v714 = vunpack.c.l.b16 %v700
    %v715 = vunpack.c.l.b16 %v701
    %v716 = vpack.c.b16 %v713, %v712
    %v717 = vpack.c.b16 %v715, %v714
    %v721 = vsel %vm94, %v704, 0
    %723 = vmatpush.bf16.msra.mxu0 0
    %724 = vmatpush.bf16.msra.mxu0 0
    %725 = vmatpush.bf16.msra.mxu0 0
    %726 = vmatpush.bf16.msra.mxu0 0
    %727 = vmatpush.bf16.msra.mxu0 0
    %728 = vmatpush.bf16.msra.mxu0 0
    %729 = vmatpush.bf16.msra.mxu0 %v717
    %730 = vmatpush.bf16.msra.mxu0 %v716
    %731 = vmatmul.bf16.gmra.mxu0 %v721
    %v732 = vpop.f32.mrf.mxu0
    %v733 = vadd.f32 %v706, %v732
    %v734 = vpop.f32.mrf.mxu0
    %v735 = vadd.f32 %v706, %v734
    %736 = vdwg.mxu0
    %v739 = vunpack.c.l.b16 %v65
    %v740 = vunpack.c.l.b16 %v66
    %v741 = vpack.c.b16 %v740, %v739
    %v743 = vsel %vm94, %v741, 0
    %745 = vmatpush.bf16.msra.mxu0 0
    %746 = vmatpush.bf16.msra.mxu0 0
    %747 = vmatpush.bf16.msra.mxu0 0
    %748 = vmatpush.bf16.msra.mxu0 0
    %749 = vmatpush.bf16.msra.mxu0 0
    %750 = vmatpush.bf16.msra.mxu0 0
    %751 = vmatpush.bf16.msra.mxu0 %v717
    %752 = vmatpush.bf16.msra.mxu0 %v716
    %753 = vmatmul.bf16.gmra.mxu0 %v743
    %v754 = vpop.f32.mrf.mxu0
    %v755 = vadd.f32 %v706, %v754
    %v756 = vpop.f32.mrf.mxu0
    %v757 = vadd.f32 %v706, %v756
    %758 = vdwg.mxu0
    %v759 = vpack.c.bf16 %v733, %v733
    %v760 = vpack.c.bf16 %v735, %v735
    %763 = vrot.lane.b32.xlu0 %v759, 120
    %v764 = vpop.permute.xlu0 %763
    %765 = vrot.lane.b32.xlu0 %v760, 120
    %v766 = vpop.permute.xlu0 %765
    %767 = vrot.lane.b32.xlu0 %v759, 112
    %v768 = vpop.permute.xlu0 %767
    %769 = vrot.lane.b32.xlu0 %v760, 112
    %v770 = vpop.permute.xlu0 %769
    %771 = vrot.lane.b32.xlu0 %v759, 104
    %v772 = vpop.permute.xlu0 %771
    %773 = vrot.lane.b32.xlu0 %v760, 104
    %v774 = vpop.permute.xlu0 %773
    %v775 = vpack.c.bf16 %v755, %v755
    %v776 = vpack.c.bf16 %v757, %v757
    %779 = vrot.lane.b32.xlu0 %v775, 120
    %v780 = vpop.permute.xlu0 %779
    %781 = vrot.lane.b32.xlu0 %v776, 120
    %v782 = vpop.permute.xlu0 %781
    %783 = vrot.lane.b32.xlu0 %v775, 112
    %v784 = vpop.permute.xlu0 %783
    %785 = vrot.lane.b32.xlu0 %v776, 112
    %v786 = vpop.permute.xlu0 %785
    %787 = vrot.lane.b32.xlu0 %v775, 104
    %v788 = vpop.permute.xlu0 %787
    %789 = vrot.lane.b32.xlu0 %v776, 104
    %v790 = vpop.permute.xlu0 %789
    %v791 = vunpack.c.l.b16 %v775
    %v792 = vpack.c.b16 %v791, %v791
    %793 = vrot.lane.b32.xlu0 %v792, 96
    %v794 = vpop.permute.xlu0 %793
    %v796 = vsel %vm132, %v759, 0
    %v799 = vsel %vm132, %v794, 0
    %801 = vmatpush.bf16.xpose.msra.mxu0 0
    %802 = vmatpush.bf16.xpose.msra.mxu0 0
    %803 = vmatpush.bf16.xpose.msra.mxu0 0
    %804 = vmatpush.bf16.xpose.msra.mxu0 0
    %805 = vmatpush.bf16.xpose.msra.mxu0 0
    %806 = vmatpush.bf16.xpose.msra.mxu0 0
    %807 = vmatpush.bf16.xpose.msra.mxu0 0
    %808 = vmatpush.bf16.xpose.msra.mxu0 %v799
    %809 = vmatmul.bf16.gmra.mxu0 %v796
    %v810 = vpop.f32.mrf.mxu0
    %v811 = vadd.f32 0.0, %v810
    %v812 = vpop.f32.mrf.mxu0
    %813 = vdwg.mxu0
    %v814 = vunpack.c.l.b16 %v776
    %v815 = vpack.c.b16 %v814, %v814
    %816 = vrot.lane.b32.xlu0 %v815, 96
    %v817 = vpop.permute.xlu0 %816
    %v819 = vsel %vm132, %v760, 0
    %v822 = vsel %vm132, %v817, 0
    %824 = vmatpush.bf16.xpose.msra.mxu0 0
    %825 = vmatpush.bf16.xpose.msra.mxu0 0
    %826 = vmatpush.bf16.xpose.msra.mxu0 0
    %827 = vmatpush.bf16.xpose.msra.mxu0 0
    %828 = vmatpush.bf16.xpose.msra.mxu0 0
    %829 = vmatpush.bf16.xpose.msra.mxu0 0
    %830 = vmatpush.bf16.xpose.msra.mxu0 0
    %831 = vmatpush.bf16.xpose.msra.mxu0 %v822
    %832 = vmatmul.bf16.gmra.mxu0 %v819
    %v833 = vpop.f32.mrf.mxu0
    %v834 = vadd.f32 0.0, %v833
    %v835 = vpop.f32.mrf.mxu0
    %836 = vdwg.mxu0
    %v837 = vunpack.c.l.b16 %v780
    %v838 = vpack.c.b16 %v837, %v837
    %839 = vrot.lane.b32.xlu0 %v838, 96
    %v840 = vpop.permute.xlu0 %839
    %v842 = vsel %vm132, %v764, 0
    %v845 = vsel %vm132, %v840, 0
    %847 = vmatpush.bf16.xpose.msra.mxu0 0
    %848 = vmatpush.bf16.xpose.msra.mxu0 0
    %849 = vmatpush.bf16.xpose.msra.mxu0 0
    %850 = vmatpush.bf16.xpose.msra.mxu0 0
    %851 = vmatpush.bf16.xpose.msra.mxu0 0
    %852 = vmatpush.bf16.xpose.msra.mxu0 0
    %853 = vmatpush.bf16.xpose.msra.mxu0 0
    %854 = vmatpush.bf16.xpose.msra.mxu0 %v845
    %855 = vmatmul.bf16.gmra.mxu0 %v842
    %v856 = vpop.f32.mrf.mxu0
    %v857 = vadd.f32 0.0, %v856
    %v858 = vpop.f32.mrf.mxu0
    %859 = vdwg.mxu0
    %v860 = vunpack.c.l.b16 %v782
    %v861 = vpack.c.b16 %v860, %v860
    %862 = vrot.lane.b32.xlu0 %v861, 96
    %v863 = vpop.permute.xlu0 %862
    %v865 = vsel %vm132, %v766, 0
    %v868 = vsel %vm132, %v863, 0
    %870 = vmatpush.bf16.xpose.msra.mxu0 0
    %871 = vmatpush.bf16.xpose.msra.mxu0 0
    %872 = vmatpush.bf16.xpose.msra.mxu0 0
    %873 = vmatpush.bf16.xpose.msra.mxu0 0
    %874 = vmatpush.bf16.xpose.msra.mxu0 0
    %875 = vmatpush.bf16.xpose.msra.mxu0 0
    %876 = vmatpush.bf16.xpose.msra.mxu0 0
    %877 = vmatpush.bf16.xpose.msra.mxu0 %v868
    %878 = vmatmul.bf16.gmra.mxu0 %v865
    %v879 = vpop.f32.mrf.mxu0
    %v880 = vadd.f32 0.0, %v879
    %v881 = vpop.f32.mrf.mxu0
    %882 = vdwg.mxu0
    %v883 = vunpack.c.l.b16 %v784
    %v884 = vpack.c.b16 %v883, %v883
    %885 = vrot.lane.b32.xlu0 %v884, 96
    %v886 = vpop.permute.xlu0 %885
    %v888 = vsel %vm132, %v768, 0
    %v891 = vsel %vm132, %v886, 0
    %893 = vmatpush.bf16.xpose.msra.mxu0 0
    %894 = vmatpush.bf16.xpose.msra.mxu0 0
    %895 = vmatpush.bf16.xpose.msra.mxu0 0
    %896 = vmatpush.bf16.xpose.msra.mxu0 0
    %897 = vmatpush.bf16.xpose.msra.mxu0 0
    %898 = vmatpush.bf16.xpose.msra.mxu0 0
    %899 = vmatpush.bf16.xpose.msra.mxu0 0
    %900 = vmatpush.bf16.xpose.msra.mxu0 %v891
    %901 = vmatmul.bf16.gmra.mxu0 %v888
    %v902 = vpop.f32.mrf.mxu0
    %v903 = vadd.f32 0.0, %v902
    %v904 = vpop.f32.mrf.mxu0
    %905 = vdwg.mxu0
    %v906 = vunpack.c.l.b16 %v786
    %v907 = vpack.c.b16 %v906, %v906
    %908 = vrot.lane.b32.xlu0 %v907, 96
    %v909 = vpop.permute.xlu0 %908
    %v911 = vsel %vm132, %v770, 0
    %v914 = vsel %vm132, %v909, 0
    %916 = vmatpush.bf16.xpose.msra.mxu0 0
    %917 = vmatpush.bf16.xpose.msra.mxu0 0
    %918 = vmatpush.bf16.xpose.msra.mxu0 0
    %919 = vmatpush.bf16.xpose.msra.mxu0 0
    %920 = vmatpush.bf16.xpose.msra.mxu0 0
    %921 = vmatpush.bf16.xpose.msra.mxu0 0
    %922 = vmatpush.bf16.xpose.msra.mxu0 0
    %923 = vmatpush.bf16.xpose.msra.mxu0 %v914
    %924 = vmatmul.bf16.gmra.mxu0 %v911
    %v925 = vpop.f32.mrf.mxu0
    %v926 = vadd.f32 0.0, %v925
    %v927 = vpop.f32.mrf.mxu0
    %928 = vdwg.mxu0
    %v929 = vunpack.c.l.b16 %v788
    %v930 = vpack.c.b16 %v929, %v929
    %931 = vrot.lane.b32.xlu0 %v930, 96
    %v932 = vpop.permute.xlu0 %931
    %v934 = vsel %vm132, %v772, 0
    %v937 = vsel %vm132, %v932, 0
    %939 = vmatpush.bf16.xpose.msra.mxu0 0
    %940 = vmatpush.bf16.xpose.msra.mxu0 0
    %941 = vmatpush.bf16.xpose.msra.mxu0 0
    %942 = vmatpush.bf16.xpose.msra.mxu0 0
    %943 = vmatpush.bf16.xpose.msra.mxu0 0
    %944 = vmatpush.bf16.xpose.msra.mxu0 0
    %945 = vmatpush.bf16.xpose.msra.mxu0 0
    %946 = vmatpush.bf16.xpose.msra.mxu0 %v937
    %947 = vmatmul.bf16.gmra.mxu0 %v934
    %v948 = vpop.f32.mrf.mxu0
    %v949 = vadd.f32 0.0, %v948
    %v950 = vpop.f32.mrf.mxu0
    %951 = vdwg.mxu0
    %v952 = vunpack.c.l.b16 %v790
    %v953 = vpack.c.b16 %v952, %v952
    %954 = vrot.lane.b32.xlu0 %v953, 96
    %v955 = vpop.permute.xlu0 %954
    %v957 = vsel %vm132, %v774, 0
    %v960 = vsel %vm132, %v955, 0
    %962 = vmatpush.bf16.xpose.msra.mxu0 0
    %963 = vmatpush.bf16.xpose.msra.mxu0 0
    %964 = vmatpush.bf16.xpose.msra.mxu0 0
    %965 = vmatpush.bf16.xpose.msra.mxu0 0
    %966 = vmatpush.bf16.xpose.msra.mxu0 0
    %967 = vmatpush.bf16.xpose.msra.mxu0 0
    %968 = vmatpush.bf16.xpose.msra.mxu0 0
    %969 = vmatpush.bf16.xpose.msra.mxu0 %v960
    %970 = vmatmul.bf16.gmra.mxu0 %v957
    %v971 = vpop.f32.mrf.mxu0
    %v972 = vadd.f32 0.0, %v971
    %v973 = vpop.f32.mrf.mxu0
    %974 = vdwg.mxu0
    %v975 = vmul.f32 %v811, 0.35355338
    %v976 = vmul.f32 %v834, 0.35355338
    %v977 = vmul.f32 %v857, 0.35355338
    %v978 = vmul.f32 %v880, 0.35355338
    %v979 = vmul.f32 %v903, 0.35355338
    %v980 = vmul.f32 %v926, 0.35355338
    %v981 = vmul.f32 %v949, 0.35355338
    %v982 = vmul.f32 %v972, 0.35355338
    %v983 = vsel %vm132, %v975, -inf
    %984 = vmax.xlane.f32.xlu0 %v983
    %v985 = vpop.xlane.xlu0 %984
    %v986 = vsel %vm132, %v976, -inf
    %987 = vmax.xlane.f32.xlu0 %v986
    %v988 = vpop.xlane.xlu0 %987
    %v989 = vsel %vm132, %v977, -inf
    %990 = vmax.xlane.f32.xlu0 %v989
    %v991 = vpop.xlane.xlu0 %990
    %v992 = vsel %vm132, %v978, -inf
    %993 = vmax.xlane.f32.xlu0 %v992
    %v994 = vpop.xlane.xlu0 %993
    %v995 = vsel %vm132, %v979, -inf
    %996 = vmax.xlane.f32.xlu0 %v995
    %v997 = vpop.xlane.xlu0 %996
    %v998 = vsel %vm132, %v980, -inf
    %999 = vmax.xlane.f32.xlu0 %v998
    %v1000 = vpop.xlane.xlu0 %999
    %v1001 = vsel %vm132, %v981, -inf
    %1002 = vmax.xlane.f32.xlu0 %v1001
    %v1003 = vpop.xlane.xlu0 %1002
    %v1004 = vsel %vm132, %v982, -inf
    %1005 = vmax.xlane.f32.xlu0 %v1004
    %v1006 = vpop.xlane.xlu0 %1005
    %v1007 = vsub.f32 %v975, %v985
    %v1008 = vsub.f32 %v976, %v988
    %v1009 = vsub.f32 %v977, %v991
    %v1010 = vsub.f32 %v978, %v994
    %v1011 = vsub.f32 %v979, %v997
    %v1012 = vsub.f32 %v980, %v1000
    %v1013 = vsub.f32 %v981, %v1003
    %v1014 = vsub.f32 %v982, %v1006
    %v1015 = vmul.f32 %v1007, 1.442695
    %v1016 = vpow.pop %v1015
    %v1017 = vmul.f32 %v1008, 1.442695
    %v1018 = vpow.pop %v1017
    %v1019 = vmul.f32 %v1009, 1.442695
    %v1020 = vpow.pop %v1019
    %v1021 = vmul.f32 %v1010, 1.442695
    %v1022 = vpow.pop %v1021
    %v1023 = vmul.f32 %v1011, 1.442695
    %v1024 = vpow.pop %v1023
    %v1025 = vmul.f32 %v1012, 1.442695
    %v1026 = vpow.pop %v1025
    %v1027 = vmul.f32 %v1013, 1.442695
    %v1028 = vpow.pop %v1027
    %v1029 = vmul.f32 %v1014, 1.442695
    %v1030 = vpow.pop %v1029
    %v1031 = vsel %vm132, %v1016, 0.0
    %1032 = vadd.xlane.f32.xlu0 %v1031
    %v1033 = vpop.xlane.xlu0 %1032
    %v1034 = vsel %vm132, %v1018, 0.0
    %1035 = vadd.xlane.f32.xlu0 %v1034
    %v1036 = vpop.xlane.xlu0 %1035
    %v1037 = vsel %vm132, %v1020, 0.0
    %1038 = vadd.xlane.f32.xlu0 %v1037
    %v1039 = vpop.xlane.xlu0 %1038
    %v1040 = vsel %vm132, %v1022, 0.0
    %1041 = vadd.xlane.f32.xlu0 %v1040
    %v1042 = vpop.xlane.xlu0 %1041
    %v1043 = vsel %vm132, %v1024, 0.0
    %1044 = vadd.xlane.f32.xlu0 %v1043
    %v1045 = vpop.xlane.xlu0 %1044
    %v1046 = vsel %vm132, %v1026, 0.0
    %1047 = vadd.xlane.f32.xlu0 %v1046
    %v1048 = vpop.xlane.xlu0 %1047
    %v1049 = vsel %vm132, %v1028, 0.0
    %1050 = vadd.xlane.f32.xlu0 %v1049
    %v1051 = vpop.xlane.xlu0 %1050
    %v1052 = vsel %vm132, %v1030, 0.0
    %1053 = vadd.xlane.f32.xlu0 %v1052
    %v1054 = vpop.xlane.xlu0 %1053
    %v1055 = vrcp.pop %v1033
    %v1056 = vrcp.pop %v1036
    %v1057 = vrcp.pop %v1039
    %v1058 = vrcp.pop %v1042
    %v1059 = vrcp.pop %v1045
    %v1060 = vrcp.pop %v1048
    %v1061 = vrcp.pop %v1051
    %v1062 = vrcp.pop %v1054
    %v1063 = vmul.f32 %v1016, %v1055
    %v1064 = vmul.f32 %v1018, %v1056
    %v1065 = vmul.f32 %v1020, %v1057
    %v1066 = vmul.f32 %v1022, %v1058
    %v1067 = vmul.f32 %v1024, %v1059
    %v1068 = vmul.f32 %v1026, %v1060
    %v1069 = vmul.f32 %v1028, %v1061
    %v1070 = vmul.f32 %v1030, %v1062
    %v1071 = vpack.c.bf16 %v1063, %v1063
    %v1072 = vpack.c.bf16 %v1064, %v1064
    %v1073 = vpack.c.bf16 %v1065, %v1065
    %v1074 = vpack.c.bf16 %v1066, %v1066
    %v1075 = vpack.c.bf16 %v1067, %v1067
    %v1076 = vpack.c.bf16 %v1068, %v1068
    %v1077 = vpack.c.bf16 %v1069, %v1069
    %v1078 = vpack.c.bf16 %v1070, %v1070
    %1079 = vrot.lane.b32.xlu0 %v792, 64
    %v1080 = vpop.permute.xlu0 %1079
    %v1082 = vsel %vm132, %v1071, 0
    %v1085 = vsel %vm422, %v1080, 0
    %1087 = vmatpush.bf16.msra.mxu0 0
    %1088 = vmatpush.bf16.msra.mxu0 0
    %1089 = vmatpush.bf16.msra.mxu0 0
    %1090 = vmatpush.bf16.msra.mxu0 0
    %1091 = vmatpush.bf16.msra.mxu0 0
    %1092 = vmatpush.bf16.msra.mxu0 0
    %1093 = vmatpush.bf16.msra.mxu0 0
    %1094 = vmatpush.bf16.msra.mxu0 %v1085
    %1095 = vmatmul.bf16.gmra.mxu0 %v1082
    %v1096 = vpop.f32.mrf.mxu0
    %v1097 = vadd.f32 0.0, %v1096
    %v1098 = vpop.f32.mrf.mxu0
    %1099 = vdwg.mxu0
    %1100 = vrot.lane.b32.xlu0 %v815, 64
    %v1101 = vpop.permute.xlu0 %1100
    %v1103 = vsel %vm132, %v1072, 0
    %v1106 = vsel %vm422, %v1101, 0
    %1108 = vmatpush.bf16.msra.mxu0 0
    %1109 = vmatpush.bf16.msra.mxu0 0
    %1110 = vmatpush.bf16.msra.mxu0 0
    %1111 = vmatpush.bf16.msra.mxu0 0
    %1112 = vmatpush.bf16.msra.mxu0 0
    %1113 = vmatpush.bf16.msra.mxu0 0
    %1114 = vmatpush.bf16.msra.mxu0 0
    %1115 = vmatpush.bf16.msra.mxu0 %v1106
    %1116 = vmatmul.bf16.gmra.mxu0 %v1103
    %v1117 = vpop.f32.mrf.mxu0
    %v1118 = vadd.f32 0.0, %v1117
    %v1119 = vpop.f32.mrf.mxu0
    %1120 = vdwg.mxu0
    %1121 = vrot.lane.b32.xlu0 %v838, 64
    %v1122 = vpop.permute.xlu0 %1121
    %v1124 = vsel %vm132, %v1073, 0
    %v1127 = vsel %vm422, %v1122, 0
    %1129 = vmatpush.bf16.msra.mxu0 0
    %1130 = vmatpush.bf16.msra.mxu0 0
    %1131 = vmatpush.bf16.msra.mxu0 0
    %1132 = vmatpush.bf16.msra.mxu0 0
    %1133 = vmatpush.bf16.msra.mxu0 0
    %1134 = vmatpush.bf16.msra.mxu0 0
    %1135 = vmatpush.bf16.msra.mxu0 0
    %1136 = vmatpush.bf16.msra.mxu0 %v1127
    %1137 = vmatmul.bf16.gmra.mxu0 %v1124
    %v1138 = vpop.f32.mrf.mxu0
    %v1139 = vadd.f32 0.0, %v1138
    %v1140 = vpop.f32.mrf.mxu0
    %1141 = vdwg.mxu0
    %1142 = vrot.lane.b32.xlu0 %v861, 64
    %v1143 = vpop.permute.xlu0 %1142
    %v1145 = vsel %vm132, %v1074, 0
    %v1148 = vsel %vm422, %v1143, 0
    %1150 = vmatpush.bf16.msra.mxu0 0
    %1151 = vmatpush.bf16.msra.mxu0 0
    %1152 = vmatpush.bf16.msra.mxu0 0
    %1153 = vmatpush.bf16.msra.mxu0 0
    %1154 = vmatpush.bf16.msra.mxu0 0
    %1155 = vmatpush.bf16.msra.mxu0 0
    %1156 = vmatpush.bf16.msra.mxu0 0
    %1157 = vmatpush.bf16.msra.mxu0 %v1148
    %1158 = vmatmul.bf16.gmra.mxu0 %v1145
    %v1159 = vpop.f32.mrf.mxu0
    %v1160 = vadd.f32 0.0, %v1159
    %v1161 = vpop.f32.mrf.mxu0
    %1162 = vdwg.mxu0
    %1163 = vrot.lane.b32.xlu0 %v884, 64
    %v1164 = vpop.permute.xlu0 %1163
    %v1166 = vsel %vm132, %v1075, 0
    %v1169 = vsel %vm422, %v1164, 0
    %1171 = vmatpush.bf16.msra.mxu0 0
    %1172 = vmatpush.bf16.msra.mxu0 0
    %1173 = vmatpush.bf16.msra.mxu0 0
    %1174 = vmatpush.bf16.msra.mxu0 0
    %1175 = vmatpush.bf16.msra.mxu0 0
    %1176 = vmatpush.bf16.msra.mxu0 0
    %1177 = vmatpush.bf16.msra.mxu0 0
    %1178 = vmatpush.bf16.msra.mxu0 %v1169
    %1179 = vmatmul.bf16.gmra.mxu0 %v1166
    %v1180 = vpop.f32.mrf.mxu0
    %v1181 = vadd.f32 0.0, %v1180
    %v1182 = vpop.f32.mrf.mxu0
    %1183 = vdwg.mxu0
    %1184 = vrot.lane.b32.xlu0 %v907, 64
    %v1185 = vpop.permute.xlu0 %1184
    %v1187 = vsel %vm132, %v1076, 0
    %v1190 = vsel %vm422, %v1185, 0
    %1192 = vmatpush.bf16.msra.mxu0 0
    %1193 = vmatpush.bf16.msra.mxu0 0
    %1194 = vmatpush.bf16.msra.mxu0 0
    %1195 = vmatpush.bf16.msra.mxu0 0
    %1196 = vmatpush.bf16.msra.mxu0 0
    %1197 = vmatpush.bf16.msra.mxu0 0
    %1198 = vmatpush.bf16.msra.mxu0 0
    %1199 = vmatpush.bf16.msra.mxu0 %v1190
    %1200 = vmatmul.bf16.gmra.mxu0 %v1187
    %v1201 = vpop.f32.mrf.mxu0
    %v1202 = vadd.f32 0.0, %v1201
    %v1203 = vpop.f32.mrf.mxu0
    %1204 = vdwg.mxu0
    %1205 = vrot.lane.b32.xlu0 %v930, 64
    %v1206 = vpop.permute.xlu0 %1205
    %v1208 = vsel %vm132, %v1077, 0
    %v1211 = vsel %vm422, %v1206, 0
    %1213 = vmatpush.bf16.msra.mxu0 0
    %1214 = vmatpush.bf16.msra.mxu0 0
    %1215 = vmatpush.bf16.msra.mxu0 0
    %1216 = vmatpush.bf16.msra.mxu0 0
    %1217 = vmatpush.bf16.msra.mxu0 0
    %1218 = vmatpush.bf16.msra.mxu0 0
    %1219 = vmatpush.bf16.msra.mxu0 0
    %1220 = vmatpush.bf16.msra.mxu0 %v1211
    %1221 = vmatmul.bf16.gmra.mxu0 %v1208
    %v1222 = vpop.f32.mrf.mxu0
    %v1223 = vadd.f32 0.0, %v1222
    %v1224 = vpop.f32.mrf.mxu0
    %1225 = vdwg.mxu0
    %1226 = vrot.lane.b32.xlu0 %v953, 64
    %v1227 = vpop.permute.xlu0 %1226
    %v1229 = vsel %vm132, %v1078, 0
    %v1232 = vsel %vm422, %v1227, 0
    %1234 = vmatpush.bf16.msra.mxu0 0
    %1235 = vmatpush.bf16.msra.mxu0 0
    %1236 = vmatpush.bf16.msra.mxu0 0
    %1237 = vmatpush.bf16.msra.mxu0 0
    %1238 = vmatpush.bf16.msra.mxu0 0
    %1239 = vmatpush.bf16.msra.mxu0 0
    %1240 = vmatpush.bf16.msra.mxu0 0
    %1241 = vmatpush.bf16.msra.mxu0 %v1232
    %1242 = vmatmul.bf16.gmra.mxu0 %v1229
    %v1243 = vpop.f32.mrf.mxu0
    %v1244 = vadd.f32 0.0, %v1243
    %v1245 = vpop.f32.mrf.mxu0
    %1246 = vdwg.mxu0
    %1249 = vrot.lane.b32.xlu0 %v1139, 8
    %v1250 = vpop.permute.xlu0 %1249
    %1251 = vrot.lane.b32.xlu0 %v1160, 8
    %v1252 = vpop.permute.xlu0 %1251
    %1257 = vrot.lane.b32.xlu0 %v1181, 16
    %v1258 = vpop.permute.xlu0 %1257
    %1259 = vrot.lane.b32.xlu0 %v1202, 16
    %v1260 = vpop.permute.xlu0 %1259
    %1265 = vrot.lane.b32.xlu0 %v1223, 24
    %v1266 = vpop.permute.xlu0 %1265
    %1267 = vrot.lane.b32.xlu0 %v1244, 24
    %v1268 = vpop.permute.xlu0 %1267
    %v1271 = vsel %vm132, %v1097, %v1250
    %v1272 = vsel %vm132, %v1118, %v1252
    %v1273 = vsel %vm612, %v1271, %v1258
    %v1274 = vsel %vm612, %v1272, %v1260
    %v1275 = vsel %vm615, %v1273, %v1266
    %v1276 = vsel %vm615, %v1274, %v1268
    %v1277 = vpack.c.bf16 %v1276, %v1275
    %v1279 = vsel %vm94, %v1277, 0
    %1281 = vmatpush.bf16.msra.mxu0 0
    %1282 = vmatpush.bf16.msra.mxu0 0
    %1283 = vmatpush.bf16.msra.mxu0 0
    %1284 = vmatpush.bf16.msra.mxu0 0
    %1285 = vmatpush.bf16.msra.mxu0 0
    %1286 = vmatpush.bf16.msra.mxu0 0
    %1287 = vmatpush.bf16.msra.mxu0 %v717
    %1288 = vmatpush.bf16.msra.mxu0 %v716
    %1289 = vmatmul.bf16.gmra.mxu0 %v1279
    %v1290 = vpop.f32.mrf.mxu0
    %v1291 = vadd.f32 %v706, %v1290
    %v1292 = vpop.f32.mrf.mxu0
    %v1293 = vadd.f32 %v706, %v1292
    %1294 = vdwg.mxu0
    %1297 = vrot.lane.b32.xlu0 %v1291, 32
    %v1298 = vpop.permute.xlu0 %1297
    %1299 = vrot.lane.b32.xlu0 %v1293, 32
    %v1300 = vpop.permute.xlu0 %1299
    %v1303 = vadd.f32 %v695, %v1298
    %v1304 = vadd.f32 %v696, %v1300
    %v1305 = vsel %vm94, %v1303, 0.0
    %1306 = vadd.xlane.f32.xlu0 %v1305
    %v1307 = vpop.xlane.xlu0 %1306
    %v1308 = vsel %vm94, %v1304, 0.0
    %1309 = vadd.xlane.f32.xlu0 %v1308
    %v1310 = vpop.xlane.xlu0 %1309
    %v1311 = vmul.f32 %v1307, %v658
    %v1312 = vmul.f32 %v1310, %v658
    %v1313 = vsub.f32 %v1303, %v1311
    %v1314 = vsub.f32 %v1304, %v1312
    %v1315 = vmul.f32 %v1313, %v1313
    %v1316 = vmul.f32 %v1314, %v1314
    %v1317 = vsel %vm94, %v1315, 0.0
    %1318 = vadd.xlane.f32.xlu0 %v1317
    %v1319 = vpop.xlane.xlu0 %1318
    %v1320 = vsel %vm94, %v1316, 0.0
    %1321 = vadd.xlane.f32.xlu0 %v1320
    %v1322 = vpop.xlane.xlu0 %1321
    %v1323 = vmul.f32 %v1319, %v658
    %v1324 = vmul.f32 %v1322, %v658
    %v1325 = vadd.f32 %v1323, 1e-05
    %v1326 = vadd.f32 %v1324, 1e-05
    %v1327 = vrsqrt.pop %v1325
    %v1328 = vmul.f32 %v1327, %v1325
    %v1329 = vmul.f32 %v1328, %v1327
    %v1330 = vmul.f32 0.5, %v1329
    %v1331 = vsub.f32 1.5, %v1330
    %v1332 = vmul.f32 %v1327, %v1331
    %vm1333 = vweird.f32 %v1325
    %vm1334 = vweird.f32 %v1327
    %vm1335 = vmor %vm1333, %vm1334
    %v1336 = vsel %vm1335, %v1327, %v1332
    %v1337 = vrsqrt.pop %v1326
    %v1338 = vmul.f32 %v1337, %v1326
    %v1339 = vmul.f32 %v1338, %v1337
    %v1340 = vmul.f32 0.5, %v1339
    %v1341 = vsub.f32 1.5, %v1340
    %v1342 = vmul.f32 %v1337, %v1341
    %vm1343 = vweird.f32 %v1326
    %vm1344 = vweird.f32 %v1337
    %vm1345 = vmor %vm1343, %vm1344
    %v1346 = vsel %vm1345, %v1337, %v1342
    %v1347 = vmul.f32 %v1313, %v1336
    %v1348 = vmul.f32 %v1314, %v1346
    %v1349 = vld [vmem:[%s4] sm:$0xf]
    %v1350 = vld [vmem:[%s4 + $0x4] sm:$0xf]
    %v1351 = vld [vmem:[%s4 + $0x8] sm:$0xf]
    %v1352 = vld [vmem:[%s4 + $0xc] sm:$0xf]
    %v1353 = vpack.c.bf16 %v1348, %v1347
    %v1354 = vld [vmem:[%s5] sm:$0x1]
    %v1356 = vperm.slane %v1354, 0
    %v1362 = vunpack.c.l.b16 %v1349
    %v1363 = vunpack.c.l.b16 %v1350
    %v1364 = vunpack.c.l.b16 %v1351
    %v1365 = vunpack.c.l.b16 %v1352
    %v1366 = vpack.c.b16 %v1363, %v1362
    %v1367 = vpack.c.b16 %v1365, %v1364
    %v1371 = vsel %vm94, %v1353, 0
    %1373 = vmatpush.bf16.msra.mxu0 0
    %1374 = vmatpush.bf16.msra.mxu0 0
    %1375 = vmatpush.bf16.msra.mxu0 0
    %1376 = vmatpush.bf16.msra.mxu0 0
    %1377 = vmatpush.bf16.msra.mxu0 0
    %1378 = vmatpush.bf16.msra.mxu0 0
    %1379 = vmatpush.bf16.msra.mxu0 %v1367
    %1380 = vmatpush.bf16.msra.mxu0 %v1366
    %1381 = vmatmul.bf16.gmra.mxu0 %v1371
    %v1382 = vpop.f32.mrf.mxu0
    %v1383 = vadd.f32 %v1356, %v1382
    %v1384 = vpop.f32.mrf.mxu0
    %v1385 = vadd.f32 %v1356, %v1384
    %1386 = vdwg.mxu0
    %v1387 = vmax.f32 %v1383, 0.0
    %v1388 = vmax.f32 %v1385, 0.0
    %v1389 = vld [vmem:[%s6] sm:$0xf]
    %v1390 = vld [vmem:[%s6 + $0x4] sm:$0xf]
    %v1391 = vld [vmem:[%s6 + $0x8] sm:$0xf]
    %v1392 = vld [vmem:[%s6 + $0xc] sm:$0xf]
    %v1393 = vld [vmem:[%s6 + $0x10] sm:$0xf]
    %v1394 = vld [vmem:[%s6 + $0x14] sm:$0xf]
    %v1395 = vld [vmem:[%s6 + $0x18] sm:$0xf]
    %v1396 = vld [vmem:[%s6 + $0x1c] sm:$0xf]
    %v1397 = vpack.c.bf16 %v1388, %v1387
    %v1398 = vld [vmem:[%s7] sm:$0x1]
    %v1400 = vperm.slane %v1398, 0
    %v1410 = vunpack.c.l.b16 %v1389
    %v1411 = vunpack.c.l.b16 %v1390
    %v1412 = vunpack.c.l.b16 %v1391
    %v1413 = vunpack.c.l.b16 %v1392
    %v1414 = vunpack.c.l.b16 %v1393
    %v1415 = vunpack.c.l.b16 %v1394
    %v1416 = vunpack.c.l.b16 %v1395
    %v1417 = vunpack.c.l.b16 %v1396
    %v1418 = vpack.c.b16 %v1411, %v1410
    %v1419 = vpack.c.b16 %v1413, %v1412
    %v1420 = vpack.c.b16 %v1415, %v1414
    %v1421 = vpack.c.b16 %v1417, %v1416
    %vm1426 = vcmask 523264
    %v1428 = vsel %vm1426, %v1397, 0
    %1430 = vmatpush.bf16.msra.mxu0 0
    %1431 = vmatpush.bf16.msra.mxu0 0
    %1432 = vmatpush.bf16.msra.mxu0 0
    %1433 = vmatpush.bf16.msra.mxu0 0
    %1434 = vmatpush.bf16.msra.mxu0 %v1421
    %1435 = vmatpush.bf16.msra.mxu0 %v1420
    %1436 = vmatpush.bf16.msra.mxu0 %v1419
    %1437 = vmatpush.bf16.msra.mxu0 %v1418
    %1438 = vmatmul.bf16.gmra.mxu0 %v1428
    %v1439 = vpop.f32.mrf.mxu0
    %v1440 = vadd.f32 %v1400, %v1439
    %v1441 = vpop.f32.mrf.mxu0
    %v1442 = vadd.f32 %v1400, %v1441
    %1443 = vdwg.mxu0
    %v1444 = vadd.f32 %v1347, %v1440
    %v1445 = vadd.f32 %v1348, %v1442
    %v1446 = vsel %vm94, %v1444, 0.0
    %1447 = vadd.xlane.f32.xlu0 %v1446
    %v1448 = vpop.xlane.xlu0 %1447
    %v1449 = vsel %vm94, %v1445, 0.0
    %1450 = vadd.xlane.f32.xlu0 %v1449
    %v1451 = vpop.xlane.xlu0 %1450
    %v1452 = vmul.f32 %v1448, %v658
    %v1453 = vmul.f32 %v1451, %v658
    %v1454 = vsub.f32 %v1444, %v1452
    %v1455 = vsub.f32 %v1445, %v1453
    %v1456 = vmul.f32 %v1454, %v1454
    %v1457 = vmul.f32 %v1455, %v1455
    %v1458 = vsel %vm94, %v1456, 0.0
    %1459 = vadd.xlane.f32.xlu0 %v1458
    %v1460 = vpop.xlane.xlu0 %1459
    %v1461 = vsel %vm94, %v1457, 0.0
    %1462 = vadd.xlane.f32.xlu0 %v1461
    %v1463 = vpop.xlane.xlu0 %1462
    %v1464 = vmul.f32 %v1460, %v658
    %v1465 = vmul.f32 %v1463, %v658
    %v1466 = vadd.f32 %v1464, 1e-05
    %v1467 = vadd.f32 %v1465, 1e-05
    %v1468 = vrsqrt.pop %v1466
    %v1469 = vmul.f32 %v1468, %v1466
    %v1470 = vmul.f32 %v1469, %v1468
    %v1471 = vmul.f32 0.5, %v1470
    %v1472 = vsub.f32 1.5, %v1471
    %v1473 = vmul.f32 %v1468, %v1472
    %vm1474 = vweird.f32 %v1466
    %vm1475 = vweird.f32 %v1468
    %vm1476 = vmor %vm1474, %vm1475
    %v1477 = vsel %vm1476, %v1468, %v1473
    %v1478 = vrsqrt.pop %v1467
    %v1479 = vmul.f32 %v1478, %v1467
    %v1480 = vmul.f32 %v1479, %v1478
    %v1481 = vmul.f32 0.5, %v1480
    %v1482 = vsub.f32 1.5, %v1481
    %v1483 = vmul.f32 %v1478, %v1482
    %vm1484 = vweird.f32 %v1467
    %vm1485 = vweird.f32 %v1478
    %vm1486 = vmor %vm1484, %vm1485
    %v1487 = vsel %vm1486, %v1478, %v1483
    %v1488 = vmul.f32 %v1454, %v1477
    %v1489 = vmul.f32 %v1455, %v1487
    %1490 = vst.msk [vmem:[#allocation7] sm:$0xff] %vm94, %v1488
    %1491 = vst.msk [vmem:[#allocation7 + $0x8] sm:$0xff] %vm94, %v1489
    // Predicated region
    $region42: #{tpu_custom_call.1} parent=1 // pred_check
      _
    $region43: #{tpu_custom_call.1} parent=1 // pred_check_branch
      %1493 = sbr.rel (0) target = $region45
    $region44: #{tpu_custom_call.1} parent=1 // pred_region
      %1495 = vsyncadd [#allocation4], 0
      %s1496 = sshll.u32 [#allocation7], 4
      %s1497 = int_to_ptr.vmem [resolvable:$true] %s1496
      %s1498 = sshll.u32 %s8, 4
      %s1499 = int_to_ptr.hbm [resolvable:$true] %s1498
      %1504 = dma.vmem_to_hbm [thread:$0]  %s1497, 256, %s1499, [#allocation4], 128, 128, 8
    $region45: #{tpu_custom_call.1} parent=1 // pred_fallthru
      _
    // Predicated region
    $region46: #{tpu_custom_call.1} parent=1 // pred_check
      _
    $region47: #{tpu_custom_call.1} parent=1 // pred_check_branch
      %1506 = sbr.rel (0) target = $region49
    $region48: #{tpu_custom_call.1} parent=1 // pred_region
      %1508 = dma.done [#allocation4], 256
    $region49: #{tpu_custom_call.1} parent=1 // pred_fallthru
      _
    %1509 = vsyncpa [#allocation3], 1
    %1510 = vsyncpa [#allocation6], 1
    %1511 = vsyncpa [#allocation4], 1

</llo_original>
